<compile_context>
chip_gen: v5e
topology: v5e:2x2
jax: 0.10.0
libtpu: 0.0.40
codegen_flags: <defaults>
</compile_context>

<pallas_src>
import functools

import jax
import jax.numpy as jnp
from jax.experimental import pallas as pl
from jax.experimental.pallas import tpu as pltpu

NUM_LYR = 4


# ----------------------------------------------------------------------------- helpers

def _round_up(v, m):
    return ((v + m - 1) // m) * m


def _pad_to(a, shape):
    pads = [(0, s - d) for d, s in zip(a.shape, shape)]
    if all(p == (0, 0) for p in pads):
        return a
    return jnp.pad(a, pads)


def _tpu_budgets():
    """Per-generation sizing knobs (rows per grid step, VMEM budgets)."""
    kind = ""
    try:
        kind = jax.devices()[0].device_kind.lower()
    except Exception:  # pragma: no cover
        pass
    if "v5" in kind or "v6" in kind:
        # 128 MiB physical VMEM per TensorCore: fewer, fatter grid steps.
        return dict(target_rows=1024, act_budget=80 << 20, vmem_cap=100 << 20,
                    two_cores=False)
    # v7x (64 MiB / TC, 2 TCs) and unknown devices: conservative budgets.
    return dict(target_rows=512, act_budget=36 << 20, vmem_cap=48 << 20,
                two_cores=("v7" in kind or "7x" in kind))


def _choose_tb(B, Lp, D, Hp, Ep, budgets):
    """Batch elements per grid step, bounded by a live-activation VMEM budget."""
    # f32 bytes per (batch, point) row for the simultaneously live values
    # (input row, h, z = [h' | proj chunk], gp, acc, out) — generous on purpose.
    per_row = 4 * (D + 4 * Hp + 3 * Ep)
    rows_by_vmem = max(8, budgets["act_budget"] // per_row)
    rows = min(budgets["target_rows"], rows_by_vmem)
    tb = max(1, rows // Lp)
    if B <= tb:
        return B                               # whole problem in one grid step
    tb = max(8, (tb // 8) * 8)                 # sublane-aligned output tile
    if budgets["two_cores"]:
        # keep the step count even so the two v7x TensorCores stay balanced
        n = -(-B // tb)
        if n > 1 and n % 2 == 1:
            for cand in range(tb - 8, 7, -8):
                if (-(-B // cand)) % 2 == 0:
                    tb = cand
                    break
    return tb


def _weight_spec(a, single_buffer):
    ndim = a.ndim
    idx = lambda *_: (0,) * ndim               # grid-invariant: weights stay resident
    if single_buffer:
        return pl.BlockSpec(a.shape, idx, pipeline_mode=pl.Buffered(1))
    return pl.BlockSpec(a.shape, idx)


def _probe_kernel(x_ref, o_ref):
    o_ref[...] = x_ref[...] + 1.0


@functools.lru_cache(maxsize=None)
def _single_buffer_supported():
    """Probe (outside jit) whether pl.Buffered(1) is accepted on pallas_call specs."""
    try:
        f = pl.pallas_call(
            _probe_kernel,
            out_shape=jax.ShapeDtypeStruct((16, 128), jnp.float32),
            grid=(2,),
            in_specs=[pl.BlockSpec((8, 128), lambda i: (0, 0),
                                   pipeline_mode=pl.Buffered(1))],
            out_specs=pl.BlockSpec((8, 128), lambda i: (i, 0)),
        )
        jax.block_until_ready(f(jnp.zeros((8, 128), jnp.float32)))
        return True
    except Exception:  # older builds without per-spec pipeline_mode support
        return False


# ------------------------------------------------------------------------------ kernel

def _point_encoder_kernel(x_ref, w_in_ref, b_in_ref, w_l0_ref, b_l_ref,
                          w_mid_ref, w_g1_ref, w_g2_ref, b_g_ref,
                          w_last_ref, b_out_ref, o_ref, *,
                          tb, npts, npts_real, cast_dtype):
    # x_ref block: (TB*Lp, D) — batch*points on sublanes, features on lanes.
    Hp = w_in_ref.shape[1]
    Ep = w_last_ref.shape[1]
    M = tb * npts

    if npts != npts_real:   # static: only traced when the point dim was padded
        pmask = jax.lax.broadcasted_iota(jnp.int32, (1, npts, 1), 1) < npts_real
    else:
        pmask = None

    def pmax(v3):
        # max over real points only (padded point rows masked to -inf)
        if pmask is not None:
            v3 = jnp.where(pmask, v3, -jnp.inf)
        return jnp.max(v3, axis=1)

    def mm(a, w_ref, idx=None):
        w = w_ref[...] if idx is None else w_ref[idx]
        return jnp.dot(a.astype(cast_dtype), w, preferred_element_type=jnp.float32)

    def gated(h, i):
        # torch: gx = x.max(dim=1, keepdim=True); relu(glyr(cat([x, gx.expand], -1)))
        #      == relu(x @ Wg1 + gx @ Wg2 + b_g)   (concat-free)
        gx = pmax(h.reshape(tb, npts, Hp))                                   # [TB, Hp]
        gp = mm(gx, w_g2_ref, i) + b_g_ref[i]
        gp = jnp.broadcast_to(gp[:, None, :], (tb, npts, Hp)).reshape(M, Hp)
        return jnp.maximum(mm(h, w_g1_ref, i) + gp, 0.0)

    # proj_in + ReLU
    h = jnp.maximum(mm(x_ref[...], w_in_ref) + b_in_ref[...], 0.0)           # [M, Hp]

    # layer 0: per-point linear + ReLU, then gated layer
    h = jnp.maximum(mm(h, w_l0_ref) + b_l_ref[0], 0.0)
    h = gated(h, 0)                                                          # xs[0]

    acc = jnp.zeros((M, Ep), jnp.float32)      # running  concat(xs, -1) @ W_out
    for i in range(1, NUM_LYR):
        # fused matmul: [ w_l[i] | w_out[i-1] ] — both consume xs[i-1]; slice boundary
        # at Hp is a 128-lane edge, so the two halves are tile-aligned.
        z = mm(h, w_mid_ref, i - 1)                                          # [M, Hp+Ep]
        acc = acc + z[:, Hp:]
        h = jnp.maximum(z[:, :Hp] + b_l_ref[i], 0.0)
        h = gated(h, i)                                                      # xs[i]
    acc = acc + mm(h, w_last_ref)

    out = acc + b_out_ref[...]                                               # [M, Ep]
    # final max over points (torch: x.max(dim=1).values) — lane-dense (TB, Ep) store
    o_ref[...] = pmax(out.reshape(tb, npts, Ep))


# ----------------------------------------------------------------------------- wrapper

def point_encoder_forward(x, params, *, num_point, pnt_cond_steps,
                          single_buffer_weights=False, use_bf16_matmul=False):
    """x: [b, t, L, D_in] float32  ->  [b, embed_dim] float32."""
    b, t, L, D = x.shape
    assert t == pnt_cond_steps
    B = b * t
    xf = x.reshape(B, L, D)                    # b t l d -> (b t) l d

    # Faithful to the PyTorch module's check `x.shape[2] != self.num_point`, which
    # compares the FEATURE dim to num_point; only inputs that skip the random
    # (torch.randperm) sampling branch are supported.
    # TODO(synk): non-deterministic sampling_uniform branch not implemented.
    assert xf.shape[2] == num_point, "random point sampling branch not supported"

    (w_in, b_in, w_l, b_l, w_g1, w_g2, b_g, w_out, b_out) = params
    H = w_in.shape[1]
    E = w_out.shape[2]
    Hp = _round_up(H, 128)                     # lane-pad hidden dim
    Ep = _round_up(E, 128)                     # lane-pad output dim (lane-dense store)
    Lp = _round_up(L, 8)                       # sublane-pad point dim

    # Zero-pad weights/biases: padded lanes of every activation stay exactly zero.
    w_in_p = _pad_to(w_in, (D, Hp))
    b_in_p = _pad_to(b_in, (1, Hp))
    w_l_p = _pad_to(w_l, (NUM_LYR, Hp, Hp))
    b_l_p = _pad_to(b_l, (NUM_LYR, 1, Hp))
    w_g1_p = _pad_to(w_g1, (NUM_LYR, Hp, Hp))
    w_g2_p = _pad_to(w_g2, (NUM_LYR, Hp, Hp))
    b_g_p = _pad_to(b_g, (NUM_LYR, 1, Hp))
    w_out_p = _pad_to(w_out, (NUM_LYR, Hp, Ep))
    b_out_p = _pad_to(b_out, (1, Ep))

    # Fused per-layer weights: xs[i] feeds both lyrs[i+1] (Hp,Hp) and proj_out chunk i.
    w_l0 = w_l_p[0]                                            # (Hp, Hp)
    w_mid = jnp.concatenate([w_l_p[1:], w_out_p[:-1]], axis=2)  # (NUM_LYR-1, Hp, Hp+Ep)
    w_last = w_out_p[NUM_LYR - 1]                              # (Hp, Ep)

    cast_dtype = jnp.bfloat16 if use_bf16_matmul else jnp.float32
    if use_bf16_matmul:
        # bf16 matmul operands, f32 accumulation; biases stay f32.
        w_in_p, w_l0, w_mid, w_g1_p, w_g2_p, w_last = (
            a.astype(jnp.bfloat16)
            for a in (w_in_p, w_l0, w_mid, w_g1_p, w_g2_p, w_last))

    budgets = _tpu_budgets()
    TB = _choose_tb(B, Lp, D, Hp, Ep, budgets)
    n_steps = pl.cdiv(B, TB)
    Bp = n_steps * TB

    if Lp != L:
        xf = jnp.pad(xf, ((0, 0), (0, Lp - L), (0, 0)))
    if Bp != B:
        xf = jnp.pad(xf, ((0, Bp - B), (0, 0), (0, 0)))
    x2 = xf.reshape(Bp * Lp, D)                # rows for the MXU

    weights = (w_in_p, b_in_p, w_l0, b_l_p, w_mid, w_g1_p, w_g2_p, b_g_p,
               w_last, b_out_p)
    wt_bytes = sum(int(w.size) * w.dtype.itemsize for w in weights)

    # Advisory cost estimate for XLA scheduling around this custom call.
    rows = Bp * Lp
    flops = rows * 2 * D * Hp
    flops += NUM_LYR * (rows * (2 * Hp * Hp       # lyrs
                                + 2 * Hp * Hp     # glyr (x part)
                                + 2 * Hp * Ep)    # proj_out chunk
                        + Bp * 2 * Hp * Hp)       # glyr (gx part, per batch element)
    cost = pl.CostEstimate(flops=int(flops), transcendentals=0,
                           bytes_accessed=int(4 * rows * D + 4 * Bp * Ep + wt_bytes))

    # VMEM budget from real buffer sizes: 2x input block + 2x output block +
    # (1x or 2x) weights + live activation set, with headroom, capped per generation.
    in_blk = 4 * TB * Lp * D
    out_blk = 4 * TB * Ep
    act_bytes = 4 * TB * Lp * (4 * Hp + 3 * Ep)
    wbuf = 1 if single_buffer_weights else 2
    vmem_needed = 2 * in_blk + 2 * out_blk + wbuf * wt_bytes + act_bytes
    vmem_limit = int(min(budgets["vmem_cap"],
                         max(16 << 20, int(1.25 * vmem_needed))))

    kern = functools.partial(_point_encoder_kernel, tb=TB, npts=Lp, npts_real=L,
                             cast_dtype=cast_dtype)
    out = pl.pallas_call(
        kern,
        out_shape=jax.ShapeDtypeStruct((Bp, Ep), jnp.float32),
        grid_spec=pltpu.PrefetchScalarGridSpec(
            num_scalar_prefetch=0,
            grid=(n_steps,),
            in_specs=[pl.BlockSpec((TB * Lp, D), lambda i: (i, 0))]
                     + [_weight_spec(w, single_buffer_weights) for w in weights],
            out_specs=pl.BlockSpec((TB, Ep), lambda i: (i, 0)),
        ),
        compiler_params=pltpu.CompilerParams(
            dimension_semantics=("parallel",),
            vmem_limit_bytes=vmem_limit),
        cost_estimate=cost,
    )(x2, *weights)

    out = out[:B, :E].reshape(b, t, E)                        # strip batch/lane padding
    return jnp.transpose(out, (0, 2, 1)).reshape(b, E * t)    # b (e t)


# ----------------------------------------------------------------------- params & ref

def init_params(key, in_dim, hidden_dim, embed_dim, pnt_cond_steps, num_lyr=NUM_LYR):
    """Deterministic synthetic weights, stored (in_features, out_features)."""
    E = embed_dim // pnt_cond_steps
    keys = jax.random.split(key, 9)
    sc = 0.1
    w_in = sc * jax.random.normal(keys[0], (in_dim, hidden_dim), jnp.float32)
    b_in = sc * jax.random.normal(keys[1], (1, hidden_dim), jnp.float32)
    w_l = sc * jax.random.normal(keys[2], (num_lyr, hidden_dim, hidden_dim), jnp.float32)
    b_l = sc * jax.random.normal(keys[3], (num_lyr, 1, hidden_dim), jnp.float32)
    # glyr weight is (2H -> H); split: first H rows act on x, last H rows on gx
    w_g1 = sc * jax.random.normal(keys[4], (num_lyr, hidden_dim, hidden_dim), jnp.float32)
    w_g2 = sc * jax.random.normal(keys[5], (num_lyr, hidden_dim, hidden_dim), jnp.float32)
    b_g = sc * jax.random.normal(keys[6], (num_lyr, 1, hidden_dim), jnp.float32)
    # proj_out (num_lyr*H -> E), stored per-layer-chunk
    w_out = sc * jax.random.normal(keys[7], (num_lyr, hidden_dim, E), jnp.float32)
    b_out = sc * jax.random.normal(keys[8], (1, E), jnp.float32)
    return (w_in, b_in, w_l, b_l, w_g1, w_g2, b_g, w_out, b_out)


def reference_forward(x, params, *, pnt_cond_steps):
    """Pure-JAX reference mirroring the PyTorch module (for validation)."""
    (w_in, b_in, w_l, b_l, w_g1, w_g2, b_g, w_out, b_out) = params
    b, t, L, D = x.shape
    xf = x.reshape(b * t, L, D)
    h = jax.nn.relu(jnp.einsum('bld,dh->blh', xf, w_in) + b_in)
    xs = []
    for i in range(NUM_LYR):
        h = jax.nn.relu(jnp.einsum('blh,hk->blk', h, w_l[i]) + b_l[i])
        gx = jnp.max(h, axis=1, keepdims=True)
        cat = jnp.concatenate([h, jnp.broadcast_to(gx, h.shape)], axis=2)
        wg = jnp.concatenate([w_g1[i], w_g2[i]], axis=0)
        h = jax.nn.relu(jnp.einsum('blh,hk->blk', cat, wg) + b_g[i])
        xs.append(h)
    cat = jnp.concatenate(xs, axis=2)
    wo = jnp.concatenate([w_out[i] for i in range(NUM_LYR)], axis=0)
    out = jnp.einsum('blh,he->ble', cat, wo) + b_out
    out = jnp.max(out, axis=1)                                # [(b t), E]
    E = out.shape[-1]
    out = out.reshape(b, t, E)
    return jnp.transpose(out, (0, 2, 1)).reshape(b, E * t)


# --------------------------------------------------------------------------------- main

if __name__ == "__main__":
    key = jax.random.PRNGKey(0)
    single_buf = _single_buffer_supported()   # probed once, outside jit

    def run_case(b, t, num_point, in_dim, hidden_dim, embed_dim,
                 use_bf16=False, tol=1e-4):
        k_x, k_p = jax.random.split(
            jax.random.fold_in(key, 1000 * b + 10 * t + num_point))
        x = jax.random.normal(k_x, (b, t, num_point, in_dim), jnp.float32)
        params = init_params(k_p, in_dim, hidden_dim, embed_dim, t)
        fwd = jax.jit(functools.partial(
            point_encoder_forward, num_point=num_point, pnt_cond_steps=t,
            single_buffer_weights=single_buf, use_bf16_matmul=use_bf16))
        y = fwd(x, params)
        jax.block_until_ready(y)
        assert y.shape == (b, embed_dim), y.shape
        y_ref = reference_forward(x, params, pnt_cond_steps=t)
        err = float(jnp.max(jnp.abs(y - y_ref)))
        assert err < tol, f"max abs err {err} (tol {tol})"

    # small config: single grid step, whole batch resident
    run_case(b=2, t=2, num_point=16, in_dim=16, hidden_dim=32, embed_dim=64)
    # num_point not a sublane multiple: exercises point padding + -inf masking
    run_case(b=2, t=1, num_point=12, in_dim=12, hidden_dim=48, embed_dim=40)
    # larger batch: multi-step grid, batch padding, parallel grid axis
    run_case(b=40, t=2, num_point=16, in_dim=16, hidden_dim=32, embed_dim=64)
    # optional bf16-matmul path (f32 accumulation): looser tolerance
    run_case(b=2, t=2, num_point=16, in_dim=16, hidden_dim=32, embed_dim=64,
             use_bf16=True, tol=5e-2)

    print("KERNEL_OK")
</pallas_src>

<mosaic_0001>
module attributes {stable_mosaic.version = 11 : i64} {
  func.func @_probe_kernel(%arg0: i32, %arg1: memref<8x128xf32, #tpu.memory_space<vmem>>, %arg2: memref<8x128xf32, #tpu.memory_space<vmem>>) attributes {dimension_semantics = [#tpu.dimension_semantics<arbitrary>], iteration_bounds = array<i64: 2>, scalar_prefetch = 0 : i64, scratch_operands = 0 : i64, tpu.core_type = #tpu.core_type<tc>, window_params = [{pipeline_mode = #tpu.pipeline_mode<synchronous>, transform_indices = @transform_0, window_bounds = array<i64: 8, 128>}, {transform_indices = @transform_1, window_bounds = array<i64: 8, 128>}]} {
    %c0 = arith.constant 0 : index
    %c0_0 = arith.constant 0 : index
    %0 = vector.load %arg1[%c0, %c0_0] : memref<8x128xf32, #tpu.memory_space<vmem>>, vector<8x128xf32>
    %cst = arith.constant 1.000000e+00 : f32
    %1 = vector.broadcast %cst : f32 to vector<8x128xf32>
    %2 = arith.addf %0, %1 : vector<8x128xf32>
    %c0_1 = arith.constant 0 : index
    %c0_2 = arith.constant 0 : index
    %3 = vector.load %arg2[%c0_1, %c0_2] : memref<8x128xf32, #tpu.memory_space<vmem>>, vector<8x128xf32>
    tpu.vector_store %arg2[%c0_1, %c0_2], %2 {strides = array<i32>} : memref<8x128xf32, #tpu.memory_space<vmem>>, vector<8x128xf32>,
    return
  }
  func.func @transform_0(%arg0: i32) -> (i32, i32) {
    %c0_i32 = arith.constant 0 : i32
    %c0_i32_0 = arith.constant 0 : i32
    %c0_i32_1 = arith.constant 0 : i32
    return %c0_i32, %c0_i32_0 : i32, i32
  }
  func.func @transform_1(%arg0: i32) -> (i32, i32) {
    %c0_i32 = arith.constant 0 : i32
    %c0_i32_0 = arith.constant 0 : i32
    return %arg0, %c0_i32 : i32, i32
  }
}

module attributes {stable_mosaic.version = 11 : i64} {
  func.func @_point_encoder_kernel(%arg0: i32, %arg1: memref<64x16xf32, #tpu.memory_space<vmem>>, %arg2: memref<16x128xf32, #tpu.memory_space<vmem>>, %arg3: memref<1x128xf32, #tpu.memory_space<vmem>>, %arg4: memref<128x128xf32, #tpu.memory_space<vmem>>, %arg5: memref<4x1x128xf32, #tpu.memory_space<vmem>>, %arg6: memref<3x128x256xf32, #tpu.memory_space<vmem>>, %arg7: memref<4x128x128xf32, #tpu.memory_space<vmem>>, %arg8: memref<4x128x128xf32, #tpu.memory_space<vmem>>, %arg9: memref<4x1x128xf32, #tpu.memory_space<vmem>>, %arg10: memref<128x128xf32, #tpu.memory_space<vmem>>, %arg11: memref<1x128xf32, #tpu.memory_space<vmem>>, %arg12: memref<4x128xf32, #tpu.memory_space<vmem>>) attributes {dimension_semantics = [#tpu.dimension_semantics<parallel>], iteration_bounds = array<i64: 1>, scalar_prefetch = 0 : i64, scratch_operands = 0 : i64, tpu.core_type = #tpu.core_type<tc>, window_params = [{transform_indices = @transform_0, window_bounds = array<i64: 64, 16>}, {pipeline_mode = #tpu.pipeline_mode<synchronous>, transform_indices = @transform_1, window_bounds = array<i64: 16, 128>}, {pipeline_mode = #tpu.pipeline_mode<synchronous>, transform_indices = @transform_2, window_bounds = array<i64: 1, 128>}, {pipeline_mode = #tpu.pipeline_mode<synchronous>, transform_indices = @transform_3, window_bounds = array<i64: 128, 128>}, {pipeline_mode = #tpu.pipeline_mode<synchronous>, transform_indices = @transform_4, window_bounds = array<i64: 4, 1, 128>}, {pipeline_mode = #tpu.pipeline_mode<synchronous>, transform_indices = @transform_5, window_bounds = array<i64: 3, 128, 256>}, {pipeline_mode = #tpu.pipeline_mode<synchronous>, transform_indices = @transform_6, window_bounds = array<i64: 4, 128, 128>}, {pipeline_mode = #tpu.pipeline_mode<synchronous>, transform_indices = @transform_7, window_bounds = array<i64: 4, 128, 128>}, {pipeline_mode = #tpu.pipeline_mode<synchronous>, transform_indices = @transform_8, window_bounds = array<i64: 4, 1, 128>}, {pipeline_mode = #tpu.pipeline_mode<synchronous>, transform_indices = @transform_9, window_bounds = array<i64: 128, 128>}, {pipeline_mode = #tpu.pipeline_mode<synchronous>, transform_indices = @transform_10, window_bounds = array<i64: 1, 128>}, {transform_indices = @transform_11, window_bounds = array<i64: 4, 128>}]} {
    %c0 = arith.constant 0 : index
    %c0_0 = arith.constant 0 : index
    %0 = vector.load %arg1[%c0, %c0_0] : memref<64x16xf32, #tpu.memory_space<vmem>>, vector<64x16xf32>
    %c0_1 = arith.constant 0 : index
    %c0_2 = arith.constant 0 : index
    %1 = vector.load %arg2[%c0_1, %c0_2] : memref<16x128xf32, #tpu.memory_space<vmem>>, vector<16x128xf32>
    %cst = arith.constant dense<0.000000e+00> : vector<64x128xf32>
    %2 = tpu.matmul %0, %1, %cst {dimension_numbers = #tpu.dot_dimension_numbers<[1], [0], [0], [1], [0, 0, 1, 1], [], []>} : vector<64x16xf32>, vector<16x128xf32>, vector<64x128xf32> -> vector<64x128xf32>
    %c0_3 = arith.constant 0 : index
    %c0_4 = arith.constant 0 : index
    %3 = vector.load %arg3[%c0_3, %c0_4] : memref<1x128xf32, #tpu.memory_space<vmem>>, vector<1x128xf32>
    %4 = vector.broadcast %3 : vector<1x128xf32> to vector<64x128xf32>
    %5 = arith.addf %2, %4 : vector<64x128xf32>
    %cst_5 = arith.constant 0.000000e+00 : f32
    %6 = vector.broadcast %cst_5 : f32 to vector<64x128xf32>
    %7 = arith.maximumf %5, %6 : vector<64x128xf32>
    %c0_6 = arith.constant 0 : index
    %c0_7 = arith.constant 0 : index
    %8 = vector.load %arg4[%c0_6, %c0_7] : memref<128x128xf32, #tpu.memory_space<vmem>>, vector<128x128xf32>
    %cst_8 = arith.constant dense<0.000000e+00> : vector<64x128xf32>
    %9 = tpu.matmul %7, %8, %cst_8 {dimension_numbers = #tpu.dot_dimension_numbers<[1], [0], [0], [1], [0, 0, 1, 1], [], []>} : vector<64x128xf32>, vector<128x128xf32>, vector<64x128xf32> -> vector<64x128xf32>
    %c0_9 = arith.constant 0 : index
    %c0_10 = arith.constant 0 : index
    %c0_11 = arith.constant 0 : index
    %10 = vector.load %arg5[%c0_9, %c0_10, %c0_11] : memref<4x1x128xf32, #tpu.memory_space<vmem>>, vector<1x1x128xf32>
    %11 = vector.shape_cast %10 : vector<1x1x128xf32> to vector<1x128xf32>
    %12 = vector.broadcast %11 : vector<1x128xf32> to vector<64x128xf32>
    %13 = arith.addf %9, %12 : vector<64x128xf32>
    %cst_12 = arith.constant 0.000000e+00 : f32
    %14 = vector.broadcast %cst_12 : f32 to vector<64x128xf32>
    %15 = arith.maximumf %13, %14 : vector<64x128xf32>
    %16 = vector.shape_cast %15 : vector<64x128xf32> to vector<4x16x128xf32>
    %cst_13 = arith.constant dense<0xFF800000> : vector<4x128xf32>
    %17 = vector.multi_reduction <maximumf>, %16, %cst_13 [1] : vector<4x16x128xf32> to vector<4x128xf32>
    %c0_14 = arith.constant 0 : index
    %c0_15 = arith.constant 0 : index
    %c0_16 = arith.constant 0 : index
    %18 = vector.load %arg8[%c0_14, %c0_15, %c0_16] : memref<4x128x128xf32, #tpu.memory_space<vmem>>, vector<1x128x128xf32>
    %19 = vector.shape_cast %18 : vector<1x128x128xf32> to vector<128x128xf32>
    %cst_17 = arith.constant dense<0.000000e+00> : vector<4x128xf32>
    %20 = tpu.matmul %17, %19, %cst_17 {dimension_numbers = #tpu.dot_dimension_numbers<[1], [0], [0], [1], [0, 0, 1, 1], [], []>} : vector<4x128xf32>, vector<128x128xf32>, vector<4x128xf32> -> vector<4x128xf32>
    %c0_18 = arith.constant 0 : index
    %c0_19 = arith.constant 0 : index
    %c0_20 = arith.constant 0 : index
    %21 = vector.load %arg9[%c0_18, %c0_19, %c0_20] : memref<4x1x128xf32, #tpu.memory_space<vmem>>, vector<1x1x128xf32>
    %22 = vector.shape_cast %21 : vector<1x1x128xf32> to vector<1x128xf32>
    %23 = vector.broadcast %22 : vector<1x128xf32> to vector<4x128xf32>
    %24 = arith.addf %20, %23 : vector<4x128xf32>
    %25 = vector.shape_cast %24 : vector<4x128xf32> to vector<4x1x128xf32>
    %26 = vector.shape_cast %25 : vector<4x1x128xf32> to vector<4x1x128xf32>
    %27 = vector.broadcast %26 : vector<4x1x128xf32> to vector<4x16x128xf32>
    %28 = vector.shape_cast %27 : vector<4x16x128xf32> to vector<64x128xf32>
    %c0_21 = arith.constant 0 : index
    %c0_22 = arith.constant 0 : index
    %c0_23 = arith.constant 0 : index
    %29 = vector.load %arg7[%c0_21, %c0_22, %c0_23] : memref<4x128x128xf32, #tpu.memory_space<vmem>>, vector<1x128x128xf32>
    %30 = vector.shape_cast %29 : vector<1x128x128xf32> to vector<128x128xf32>
    %cst_24 = arith.constant dense<0.000000e+00> : vector<64x128xf32>
    %31 = tpu.matmul %15, %30, %cst_24 {dimension_numbers = #tpu.dot_dimension_numbers<[1], [0], [0], [1], [0, 0, 1, 1], [], []>} : vector<64x128xf32>, vector<128x128xf32>, vector<64x128xf32> -> vector<64x128xf32>
    %32 = arith.addf %31, %28 : vector<64x128xf32>
    %cst_25 = arith.constant 0.000000e+00 : f32
    %33 = vector.broadcast %cst_25 : f32 to vector<64x128xf32>
    %34 = arith.maximumf %32, %33 : vector<64x128xf32>
    %cst_26 = arith.constant 0.000000e+00 : f32
    %35 = vector.broadcast %cst_26 : f32 to vector<64x128xf32>
    %c0_27 = arith.constant 0 : index
    %c0_28 = arith.constant 0 : index
    %c0_29 = arith.constant 0 : index
    %36 = vector.load %arg6[%c0_27, %c0_28, %c0_29] : memref<3x128x256xf32, #tpu.memory_space<vmem>>, vector<1x128x256xf32>
    %37 = vector.shape_cast %36 : vector<1x128x256xf32> to vector<128x256xf32>
    %cst_30 = arith.constant dense<0.000000e+00> : vector<64x256xf32>
    %38 = tpu.matmul %34, %37, %cst_30 {dimension_numbers = #tpu.dot_dimension_numbers<[1], [0], [0], [1], [0, 0, 1, 1], [], []>} : vector<64x128xf32>, vector<128x256xf32>, vector<64x256xf32> -> vector<64x256xf32>
    %39 = vector.extract_strided_slice %38 {offsets = [0, 128], sizes = [64, 128], strides = [1, 1]} : vector<64x256xf32> to vector<64x128xf32>
    %40 = arith.addf %35, %39 : vector<64x128xf32>
    %41 = vector.extract_strided_slice %38 {offsets = [0, 0], sizes = [64, 128], strides = [1, 1]} : vector<64x256xf32> to vector<64x128xf32>
    %c1 = arith.constant 1 : index
    %c0_31 = arith.constant 0 : index
    %c0_32 = arith.constant 0 : index
    %42 = vector.load %arg5[%c1, %c0_31, %c0_32] : memref<4x1x128xf32, #tpu.memory_space<vmem>>, vector<1x1x128xf32>
    %43 = vector.shape_cast %42 : vector<1x1x128xf32> to vector<1x128xf32>
    %44 = vector.broadcast %43 : vector<1x128xf32> to vector<64x128xf32>
    %45 = arith.addf %41, %44 : vector<64x128xf32>
    %cst_33 = arith.constant 0.000000e+00 : f32
    %46 = vector.broadcast %cst_33 : f32 to vector<64x128xf32>
    %47 = arith.maximumf %45, %46 : vector<64x128xf32>
    %48 = vector.shape_cast %47 : vector<64x128xf32> to vector<4x16x128xf32>
    %cst_34 = arith.constant dense<0xFF800000> : vector<4x128xf32>
    %49 = vector.multi_reduction <maximumf>, %48, %cst_34 [1] : vector<4x16x128xf32> to vector<4x128xf32>
    %c1_35 = arith.constant 1 : index
    %c0_36 = arith.constant 0 : index
    %c0_37 = arith.constant 0 : index
    %50 = vector.load %arg8[%c1_35, %c0_36, %c0_37] : memref<4x128x128xf32, #tpu.memory_space<vmem>>, vector<1x128x128xf32>
    %51 = vector.shape_cast %50 : vector<1x128x128xf32> to vector<128x128xf32>
    %cst_38 = arith.constant dense<0.000000e+00> : vector<4x128xf32>
    %52 = tpu.matmul %49, %51, %cst_38 {dimension_numbers = #tpu.dot_dimension_numbers<[1], [0], [0], [1], [0, 0, 1, 1], [], []>} : vector<4x128xf32>, vector<128x128xf32>, vector<4x128xf32> -> vector<4x128xf32>
    %c1_39 = arith.constant 1 : index
    %c0_40 = arith.constant 0 : index
    %c0_41 = arith.constant 0 : index
    %53 = vector.load %arg9[%c1_39, %c0_40, %c0_41] : memref<4x1x128xf32, #tpu.memory_space<vmem>>, vector<1x1x128xf32>
    %54 = vector.shape_cast %53 : vector<1x1x128xf32> to vector<1x128xf32>
    %55 = vector.broadcast %54 : vector<1x128xf32> to vector<4x128xf32>
    %56 = arith.addf %52, %55 : vector<4x128xf32>
    %57 = vector.shape_cast %56 : vector<4x128xf32> to vector<4x1x128xf32>
    %58 = vector.shape_cast %57 : vector<4x1x128xf32> to vector<4x1x128xf32>
    %59 = vector.broadcast %58 : vector<4x1x128xf32> to vector<4x16x128xf32>
    %60 = vector.shape_cast %59 : vector<4x16x128xf32> to vector<64x128xf32>
    %c1_42 = arith.constant 1 : index
    %c0_43 = arith.constant 0 : index
    %c0_44 = arith.constant 0 : index
    %61 = vector.load %arg7[%c1_42, %c0_43, %c0_44] : memref<4x128x128xf32, #tpu.memory_space<vmem>>, vector<1x128x128xf32>
    %62 = vector.shape_cast %61 : vector<1x128x128xf32> to vector<128x128xf32>
    %cst_45 = arith.constant dense<0.000000e+00> : vector<64x128xf32>
    %63 = tpu.matmul %47, %62, %cst_45 {dimension_numbers = #tpu.dot_dimension_numbers<[1], [0], [0], [1], [0, 0, 1, 1], [], []>} : vector<64x128xf32>, vector<128x128xf32>, vector<64x128xf32> -> vector<64x128xf32>
    %64 = arith.addf %63, %60 : vector<64x128xf32>
    %cst_46 = arith.constant 0.000000e+00 : f32
    %65 = vector.broadcast %cst_46 : f32 to vector<64x128xf32>
    %66 = arith.maximumf %64, %65 : vector<64x128xf32>
    %c1_47 = arith.constant 1 : index
    %c0_48 = arith.constant 0 : index
    %c0_49 = arith.constant 0 : index
    %67 = vector.load %arg6[%c1_47, %c0_48, %c0_49] : memref<3x128x256xf32, #tpu.memory_space<vmem>>, vector<1x128x256xf32>
    %68 = vector.shape_cast %67 : vector<1x128x256xf32> to vector<128x256xf32>
    %cst_50 = arith.constant dense<0.000000e+00> : vector<64x256xf32>
    %69 = tpu.matmul %66, %68, %cst_50 {dimension_numbers = #tpu.dot_dimension_numbers<[1], [0], [0], [1], [0, 0, 1, 1], [], []>} : vector<64x128xf32>, vector<128x256xf32>, vector<64x256xf32> -> vector<64x256xf32>
    %70 = vector.extract_strided_slice %69 {offsets = [0, 128], sizes = [64, 128], strides = [1, 1]} : vector<64x256xf32> to vector<64x128xf32>
    %71 = arith.addf %40, %70 : vector<64x128xf32>
    %72 = vector.extract_strided_slice %69 {offsets = [0, 0], sizes = [64, 128], strides = [1, 1]} : vector<64x256xf32> to vector<64x128xf32>
    %c2 = arith.constant 2 : index
    %c0_51 = arith.constant 0 : index
    %c0_52 = arith.constant 0 : index
    %73 = vector.load %arg5[%c2, %c0_51, %c0_52] : memref<4x1x128xf32, #tpu.memory_space<vmem>>, vector<1x1x128xf32>
    %74 = vector.shape_cast %73 : vector<1x1x128xf32> to vector<1x128xf32>
    %75 = vector.broadcast %74 : vector<1x128xf32> to vector<64x128xf32>
    %76 = arith.addf %72, %75 : vector<64x128xf32>
    %cst_53 = arith.constant 0.000000e+00 : f32
    %77 = vector.broadcast %cst_53 : f32 to vector<64x128xf32>
    %78 = arith.maximumf %76, %77 : vector<64x128xf32>
    %79 = vector.shape_cast %78 : vector<64x128xf32> to vector<4x16x128xf32>
    %cst_54 = arith.constant dense<0xFF800000> : vector<4x128xf32>
    %80 = vector.multi_reduction <maximumf>, %79, %cst_54 [1] : vector<4x16x128xf32> to vector<4x128xf32>
    %c2_55 = arith.constant 2 : index
    %c0_56 = arith.constant 0 : index
    %c0_57 = arith.constant 0 : index
    %81 = vector.load %arg8[%c2_55, %c0_56, %c0_57] : memref<4x128x128xf32, #tpu.memory_space<vmem>>, vector<1x128x128xf32>
    %82 = vector.shape_cast %81 : vector<1x128x128xf32> to vector<128x128xf32>
    %cst_58 = arith.constant dense<0.000000e+00> : vector<4x128xf32>
    %83 = tpu.matmul %80, %82, %cst_58 {dimension_numbers = #tpu.dot_dimension_numbers<[1], [0], [0], [1], [0, 0, 1, 1], [], []>} : vector<4x128xf32>, vector<128x128xf32>, vector<4x128xf32> -> vector<4x128xf32>
    %c2_59 = arith.constant 2 : index
    %c0_60 = arith.constant 0 : index
    %c0_61 = arith.constant 0 : index
    %84 = vector.load %arg9[%c2_59, %c0_60, %c0_61] : memref<4x1x128xf32, #tpu.memory_space<vmem>>, vector<1x1x128xf32>
    %85 = vector.shape_cast %84 : vector<1x1x128xf32> to vector<1x128xf32>
    %86 = vector.broadcast %85 : vector<1x128xf32> to vector<4x128xf32>
    %87 = arith.addf %83, %86 : vector<4x128xf32>
    %88 = vector.shape_cast %87 : vector<4x128xf32> to vector<4x1x128xf32>
    %89 = vector.shape_cast %88 : vector<4x1x128xf32> to vector<4x1x128xf32>
    %90 = vector.broadcast %89 : vector<4x1x128xf32> to vector<4x16x128xf32>
    %91 = vector.shape_cast %90 : vector<4x16x128xf32> to vector<64x128xf32>
    %c2_62 = arith.constant 2 : index
    %c0_63 = arith.constant 0 : index
    %c0_64 = arith.constant 0 : index
    %92 = vector.load %arg7[%c2_62, %c0_63, %c0_64] : memref<4x128x128xf32, #tpu.memory_space<vmem>>, vector<1x128x128xf32>
    %93 = vector.shape_cast %92 : vector<1x128x128xf32> to vector<128x128xf32>
    %cst_65 = arith.constant dense<0.000000e+00> : vector<64x128xf32>
    %94 = tpu.matmul %78, %93, %cst_65 {dimension_numbers = #tpu.dot_dimension_numbers<[1], [0], [0], [1], [0, 0, 1, 1], [], []>} : vector<64x128xf32>, vector<128x128xf32>, vector<64x128xf32> -> vector<64x128xf32>
    %95 = arith.addf %94, %91 : vector<64x128xf32>
    %cst_66 = arith.constant 0.000000e+00 : f32
    %96 = vector.broadcast %cst_66 : f32 to vector<64x128xf32>
    %97 = arith.maximumf %95, %96 : vector<64x128xf32>
    %c2_67 = arith.constant 2 : index
    %c0_68 = arith.constant 0 : index
    %c0_69 = arith.constant 0 : index
    %98 = vector.load %arg6[%c2_67, %c0_68, %c0_69] : memref<3x128x256xf32, #tpu.memory_space<vmem>>, vector<1x128x256xf32>
    %99 = vector.shape_cast %98 : vector<1x128x256xf32> to vector<128x256xf32>
    %cst_70 = arith.constant dense<0.000000e+00> : vector<64x256xf32>
    %100 = tpu.matmul %97, %99, %cst_70 {dimension_numbers = #tpu.dot_dimension_numbers<[1], [0], [0], [1], [0, 0, 1, 1], [], []>} : vector<64x128xf32>, vector<128x256xf32>, vector<64x256xf32> -> vector<64x256xf32>
    %101 = vector.extract_strided_slice %100 {offsets = [0, 128], sizes = [64, 128], strides = [1, 1]} : vector<64x256xf32> to vector<64x128xf32>
    %102 = arith.addf %71, %101 : vector<64x128xf32>
    %103 = vector.extract_strided_slice %100 {offsets = [0, 0], sizes = [64, 128], strides = [1, 1]} : vector<64x256xf32> to vector<64x128xf32>
    %c3 = arith.constant 3 : index
    %c0_71 = arith.constant 0 : index
    %c0_72 = arith.constant 0 : index
    %104 = vector.load %arg5[%c3, %c0_71, %c0_72] : memref<4x1x128xf32, #tpu.memory_space<vmem>>, vector<1x1x128xf32>
    %105 = vector.shape_cast %104 : vector<1x1x128xf32> to vector<1x128xf32>
    %106 = vector.broadcast %105 : vector<1x128xf32> to vector<64x128xf32>
    %107 = arith.addf %103, %106 : vector<64x128xf32>
    %cst_73 = arith.constant 0.000000e+00 : f32
    %108 = vector.broadcast %cst_73 : f32 to vector<64x128xf32>
    %109 = arith.maximumf %107, %108 : vector<64x128xf32>
    %110 = vector.shape_cast %109 : vector<64x128xf32> to vector<4x16x128xf32>
    %cst_74 = arith.constant dense<0xFF800000> : vector<4x128xf32>
    %111 = vector.multi_reduction <maximumf>, %110, %cst_74 [1] : vector<4x16x128xf32> to vector<4x128xf32>
    %c3_75 = arith.constant 3 : index
    %c0_76 = arith.constant 0 : index
    %c0_77 = arith.constant 0 : index
    %112 = vector.load %arg8[%c3_75, %c0_76, %c0_77] : memref<4x128x128xf32, #tpu.memory_space<vmem>>, vector<1x128x128xf32>
    %113 = vector.shape_cast %112 : vector<1x128x128xf32> to vector<128x128xf32>
    %cst_78 = arith.constant dense<0.000000e+00> : vector<4x128xf32>
    %114 = tpu.matmul %111, %113, %cst_78 {dimension_numbers = #tpu.dot_dimension_numbers<[1], [0], [0], [1], [0, 0, 1, 1], [], []>} : vector<4x128xf32>, vector<128x128xf32>, vector<4x128xf32> -> vector<4x128xf32>
    %c3_79 = arith.constant 3 : index
    %c0_80 = arith.constant 0 : index
    %c0_81 = arith.constant 0 : index
    %115 = vector.load %arg9[%c3_79, %c0_80, %c0_81] : memref<4x1x128xf32, #tpu.memory_space<vmem>>, vector<1x1x128xf32>
    %116 = vector.shape_cast %115 : vector<1x1x128xf32> to vector<1x128xf32>
    %117 = vector.broadcast %116 : vector<1x128xf32> to vector<4x128xf32>
    %118 = arith.addf %114, %117 : vector<4x128xf32>
    %119 = vector.shape_cast %118 : vector<4x128xf32> to vector<4x1x128xf32>
    %120 = vector.shape_cast %119 : vector<4x1x128xf32> to vector<4x1x128xf32>
    %121 = vector.broadcast %120 : vector<4x1x128xf32> to vector<4x16x128xf32>
    %122 = vector.shape_cast %121 : vector<4x16x128xf32> to vector<64x128xf32>
    %c3_82 = arith.constant 3 : index
    %c0_83 = arith.constant 0 : index
    %c0_84 = arith.constant 0 : index
    %123 = vector.load %arg7[%c3_82, %c0_83, %c0_84] : memref<4x128x128xf32, #tpu.memory_space<vmem>>, vector<1x128x128xf32>
    %124 = vector.shape_cast %123 : vector<1x128x128xf32> to vector<128x128xf32>
    %cst_85 = arith.constant dense<0.000000e+00> : vector<64x128xf32>
    %125 = tpu.matmul %109, %124, %cst_85 {dimension_numbers = #tpu.dot_dimension_numbers<[1], [0], [0], [1], [0, 0, 1, 1], [], []>} : vector<64x128xf32>, vector<128x128xf32>, vector<64x128xf32> -> vector<64x128xf32>
    %126 = arith.addf %125, %122 : vector<64x128xf32>
    %cst_86 = arith.constant 0.000000e+00 : f32
    %127 = vector.broadcast %cst_86 : f32 to vector<64x128xf32>
    %128 = arith.maximumf %126, %127 : vector<64x128xf32>
    %c0_87 = arith.constant 0 : index
    %c0_88 = arith.constant 0 : index
    %129 = vector.load %arg10[%c0_87, %c0_88] : memref<128x128xf32, #tpu.memory_space<vmem>>, vector<128x128xf32>
    %cst_89 = arith.constant dense<0.000000e+00> : vector<64x128xf32>
    %130 = tpu.matmul %128, %129, %cst_89 {dimension_numbers = #tpu.dot_dimension_numbers<[1], [0], [0], [1], [0, 0, 1, 1], [], []>} : vector<64x128xf32>, vector<128x128xf32>, vector<64x128xf32> -> vector<64x128xf32>
    %131 = arith.addf %102, %130 : vector<64x128xf32>
    %c0_90 = arith.constant 0 : index
    %c0_91 = arith.constant 0 : index
    %132 = vector.load %arg11[%c0_90, %c0_91] : memref<1x128xf32, #tpu.memory_space<vmem>>, vector<1x128xf32>
    %133 = vector.broadcast %132 : vector<1x128xf32> to vector<64x128xf32>
    %134 = arith.addf %131, %133 : vector<64x128xf32>
    %135 = vector.shape_cast %134 : vector<64x128xf32> to vector<4x16x128xf32>
    %cst_92 = arith.constant dense<0xFF800000> : vector<4x128xf32>
    %136 = vector.multi_reduction <maximumf>, %135, %cst_92 [1] : vector<4x16x128xf32> to vector<4x128xf32>
    %c0_93 = arith.constant 0 : index
    %c0_94 = arith.constant 0 : index
    %137 = vector.load %arg12[%c0_93, %c0_94] : memref<4x128xf32, #tpu.memory_space<vmem>>, vector<4x128xf32>
    tpu.vector_store %arg12[%c0_93, %c0_94], %136 {strides = array<i32>} : memref<4x128xf32, #tpu.memory_space<vmem>>, vector<4x128xf32>,
    return
  }
  func.func @transform_0(%arg0: i32) -> (i32, i32) {
    %c0_i32 = arith.constant 0 : i32
    %c0_i32_0 = arith.constant 0 : i32
    return %arg0, %c0_i32 : i32, i32
  }
  func.func @transform_1(%arg0: i32) -> (i32, i32) {
    %c0_i32 = arith.constant 0 : i32
    %c0_i32_0 = arith.constant 0 : i32
    %c0_i32_1 = arith.constant 0 : i32
    return %c0_i32, %c0_i32_0 : i32, i32
  }
  func.func @transform_2(%arg0: i32) -> (i32, i32) {
    %c0_i32 = arith.constant 0 : i32
    %c0_i32_0 = arith.constant 0 : i32
    %c0_i32_1 = arith.constant 0 : i32
    return %c0_i32, %c0_i32_0 : i32, i32
  }
  func.func @transform_3(%arg0: i32) -> (i32, i32) {
    %c0_i32 = arith.constant 0 : i32
    %c0_i32_0 = arith.constant 0 : i32
    %c0_i32_1 = arith.constant 0 : i32
    return %c0_i32, %c0_i32_0 : i32, i32
  }
  func.func @transform_4(%arg0: i32) -> (i32, i32, i32) {
    %c0_i32 = arith.constant 0 : i32
    %c0_i32_0 = arith.constant 0 : i32
    %c0_i32_1 = arith.constant 0 : i32
    %c0_i32_2 = arith.constant 0 : i32
    return %c0_i32, %c0_i32_0, %c0_i32_1 : i32, i32, i32
  }
  func.func @transform_5(%arg0: i32) -> (i32, i32, i32) {
    %c0_i32 = arith.constant 0 : i32
    %c0_i32_0 = arith.constant 0 : i32
    %c0_i32_1 = arith.constant 0 : i32
    %c0_i32_2 = arith.constant 0 : i32
    return %c0_i32, %c0_i32_0, %c0_i32_1 : i32, i32, i32
  }
  func.func @transform_6(%arg0: i32) -> (i32, i32, i32) {
    %c0_i32 = arith.constant 0 : i32
    %c0_i32_0 = arith.constant 0 : i32
    %c0_i32_1 = arith.constant 0 : i32
    %c0_i32_2 = arith.constant 0 : i32
    return %c0_i32, %c0_i32_0, %c0_i32_1 : i32, i32, i32
  }
  func.func @transform_7(%arg0: i32) -> (i32, i32, i32) {
    %c0_i32 = arith.constant 0 : i32
    %c0_i32_0 = arith.constant 0 : i32
    %c0_i32_1 = arith.constant 0 : i32
    %c0_i32_2 = arith.constant 0 : i32
    return %c0_i32, %c0_i32_0, %c0_i32_1 : i32, i32, i32
  }
  func.func @transform_8(%arg0: i32) -> (i32, i32, i32) {
    %c0_i32 = arith.constant 0 : i32
    %c0_i32_0 = arith.constant 0 : i32
    %c0_i32_1 = arith.constant 0 : i32
    %c0_i32_2 = arith.constant 0 : i32
    return %c0_i32, %c0_i32_0, %c0_i32_1 : i32, i32, i32
  }
  func.func @transform_9(%arg0: i32) -> (i32, i32) {
    %c0_i32 = arith.constant 0 : i32
    %c0_i32_0 = arith.constant 0 : i32
    %c0_i32_1 = arith.constant 0 : i32
    return %c0_i32, %c0_i32_0 : i32, i32
  }
  func.func @transform_10(%arg0: i32) -> (i32, i32) {
    %c0_i32 = arith.constant 0 : i32
    %c0_i32_0 = arith.constant 0 : i32
    %c0_i32_1 = arith.constant 0 : i32
    return %c0_i32, %c0_i32_0 : i32, i32
  }
  func.func @transform_11(%arg0: i32) -> (i32, i32) {
    %c0_i32 = arith.constant 0 : i32
    %c0_i32_0 = arith.constant 0 : i32
    return %arg0, %c0_i32 : i32, i32
  }
}

</mosaic_0001>

<llo_original>
// kernel: tpu_custom_call.1
$region0: #{tpu_custom_call.1}
  #allocation0 [shape = 'u32[]', space=smem, size = 0x4, offset = 0x4, fixed_abs, tag = 'smem constant byte address 0x4 - core index']
  #allocation1 [shape = 'u32[72,128]{1,0:T(1,128)}', space=vmem, size = 0x9000, scoped, tag = 'internal scratch']
  %s0 = inlined_call_operand.hbm [shape: f32[8,128], index: 0, kind: input, shape index: {}]
  %s1 = inlined_call_operand.hbm [shape: f32[16,128], index: 1, kind: output, shape index: {}]
  %s2 = sld [smem:[#allocation0]]
  $region41: #{tpu_custom_call.1} parent=0
    _
  %s4 = ssub.s32 1, %s2
  %s5 = scalar_select 0, %s4, %s2
  $region1: #{tpu_custom_call.1} parent=0
    #allocation2 [shape = 'u8[4096]{0}', space=vmem, size = 0x1000, scoped, tag = 'input window, operand 0, single buffered']
    #allocation3 [shape = 's32[2]{0}', space=sflag, size = 0x8, scoped, tag = 'scoped memory for tpu_custom_call.1']
    #allocation4 [shape = 's32[2]{0}', space=sflag, size = 0x8, scoped, tag = 'scoped memory for tpu_custom_call.1']
    #allocation5 [shape = 'u8[8192]{0}', space=vmem, size = 0x2000, scoped, tag = 'output window, operand 0']
    %6 = vsyncpa [#allocation3], 0
    %7 = vsyncpa [#allocation4], 0
    %s8 = scalar_lea.sflag [#allocation4], 1
    %9 = vsyncpa %s8, 0
    loop: start=0, step=1, limit=4
    $region2: #{tpu_custom_call.1} parent=1 // loop_pre_header
      _
    $region3: #{tpu_custom_call.1} parent=1 // loop_header
      %s11 = sphi 0, %s15
      %p12 = scmp.ge.s32.totalorder %s11, 4
      %s19 = sphi 0, %s19
      %s21 = sphi 0, %s19
      %s22 = sphi 0, %s21
      %s36 = sphi 0, %s22
      %s42 = sphi 0, %s44
      %s45 = sphi 0, %s42
      %s46 = sphi 0, %s45
      %s62 = sphi 0, %s46
    $region4: #{tpu_custom_call.1} parent=1 // loop_header_branch
      %14 = sbr.rel (%p12) target = $region8
    $region5: #{tpu_custom_call.1} parent=1 // loop_body
      %s16 = ssub.s32 %s11, 1
      %s17 = ssub.s32 %s11, 2
      %s18 = sadd.s32 %s11, 1
      %s20 = sadd.s32 %s19, 1
      %p23 = scmp.eq.s32.totalorder %s11, 1
      %p24 = scmp.ne.s32.totalorder %s19, %s21
      %p25 = scmp.eq.s32.totalorder %s11, 0
      %p26 = por %p24, %p25
      %p27 = scmp.ne.s32.totalorder %s19, %s21
      %p28 = scmp.eq.s32.totalorder %s16, 1
      %p29 = por %p27, %p28
      %p30 = scmp.ne.s32.totalorder %s21, %s22
      %p31 = scmp.eq.s32.totalorder %s16, 0
      %p32 = por %p30, %p31
      %p33 = scmp.ne.s32.totalorder %s21, %s22
      %p34 = scmp.eq.s32.totalorder %s17, 1
      %p35 = por %p33, %p34
      %p37 = scmp.ne.s32.totalorder %s22, %s36
      %p38 = scmp.eq.s32.totalorder %s17, 0
      %p39 = por %p37, %p38
      %s40 = ssub.s32 %s11, %s18
      %p41 = scmp.eq.s32.totalorder %s40, 0
      %s43 = sadd.s32 %s42, 1
      %s44 = scalar_select %p41, %s42, %s43
      %p47 = pneg %p41
      %p48 = scmp.eq.s32.totalorder %s11, 1
      %p49 = por %p47, %p48
      %p50 = scmp.ne.s32.totalorder %s42, %s45
      %p51 = scmp.eq.s32.totalorder %s11, 0
      %p52 = por %p50, %p51
      %p53 = scmp.ne.s32.totalorder %s42, %s45
      %p54 = scmp.eq.s32.totalorder %s16, 1
      %p55 = por %p53, %p54
      %p56 = scmp.ne.s32.totalorder %s45, %s46
      %p57 = scmp.eq.s32.totalorder %s16, 0
      %p58 = por %p56, %p57
      %p59 = scmp.ne.s32.totalorder %s45, %s46
      %p60 = scmp.eq.s32.totalorder %s17, 1
      %p61 = por %p59, %p60
      %p63 = scmp.ne.s32.totalorder %s46, %s62
      %p64 = scmp.eq.s32.totalorder %s17, 0
      %p65 = por %p63, %p64
      %p66 = scmp.le.s32.totalorder 1, %s11
      %p67 = scmp.lt.s32.totalorder %s11, 3
      %p68 = pnand %p66, %p67
      %p69 = pneg %p68
      // Predicated region
      $region9: #{tpu_custom_call.1} parent=5 // pred_check
        _
      $region10: #{tpu_custom_call.1} parent=5 // pred_check_branch
        %71 = sbr.rel (%p68) target = $region12
      $region11: #{tpu_custom_call.1} parent=5 // pred_region
        %s72 = ssub.s32 %s11, 1
        // Predicated region
        $region13: #{tpu_custom_call.1} parent=11 // pred_check
          %p73 = pneg %p32
        $region14: #{tpu_custom_call.1} parent=11 // pred_check_branch
          %75 = sbr.rel (%p73) target = $region16
        $region15: #{tpu_custom_call.1} parent=11 // pred_region
          %77 = vsyncadd [#allocation3], 0
          %s79 = sshll.u32 %s0, 4
          %s80 = int_to_ptr.hbm [resolvable:$true] %s79
          %s81 = sshll.u32 [#allocation2], 4
          %s82 = int_to_ptr.vmem [resolvable:$true] %s81
          %84 = dma.hbm_to_vmem [thread:$0]  %s80, 128, %s82, [#allocation3]
        $region16: #{tpu_custom_call.1} parent=11 // pred_fallthru
          _
      $region12: #{tpu_custom_call.1} parent=5 // pred_fallthru
        _
      %p85 = scmp.lt.s32.totalorder %s11, 2
      // Predicated region
      $region17: #{tpu_custom_call.1} parent=5 // pred_check
        %p86 = pneg %p85
      $region18: #{tpu_custom_call.1} parent=5 // pred_check_branch
        %88 = sbr.rel (%p86) target = $region20
      $region19: #{tpu_custom_call.1} parent=5 // pred_region
        _
      $region20: #{tpu_custom_call.1} parent=5 // pred_fallthru
        _
      %p89 = scmp.le.s32.totalorder 1, %s11
      %p90 = scmp.lt.s32.totalorder %s11, 3
      %p91 = pnand %p89, %p90
      %p92 = pneg %p91
      // Predicated region
      $region21: #{tpu_custom_call.1} parent=5 // pred_check
        _
      $region22: #{tpu_custom_call.1} parent=5 // pred_check_branch
        %94 = sbr.rel (%p91) target = $region24
      $region23: #{tpu_custom_call.1} parent=5 // pred_region
        %s95 = ssub.s32 %s11, 1
        // Predicated region
        $region25: #{tpu_custom_call.1} parent=23 // pred_check
          %p96 = pneg %p32
        $region26: #{tpu_custom_call.1} parent=23 // pred_check_branch
          %98 = sbr.rel (%p96) target = $region28
        $region27: #{tpu_custom_call.1} parent=23 // pred_region
          %100 = dma.done [#allocation3], 128
        $region28: #{tpu_custom_call.1} parent=23 // pred_fallthru
          _
        %p101 = pneg %p32
        %p102 = pneg %p29
        %p103 = pneg %p58
        %p104 = pneg %p55
        %s105 = sand.u32 %s45, 1
        %s106 = scalar_lea.sflag [#allocation4], %s105
        %s107 = sand.u32 %s45, 1
        %s108 = smul.addr %s107, 8
        %s109 = scalar_lea.vmem [#allocation5], %s108
        %v110 = vld [vmem:[#allocation2] sm:$0xff]
        %v111 = vadd.f32 %v110, 1.0
        %112 = vst [vmem:[%s109] sm:$0xff] %v111
        %s113 = sand.u32 %s45, 1
        %s114 = scalar_lea.sflag [#allocation4], %s113
        %s115 = sand.u32 %s45, 1
        %s116 = smul.addr %s115, 8
        %s117 = scalar_lea.vmem [#allocation5], %s116
        // Predicated region
        $region29: #{tpu_custom_call.1} parent=23 // pred_check
          %p118 = pneg %p55
        $region30: #{tpu_custom_call.1} parent=23 // pred_check_branch
          %120 = sbr.rel (%p118) target = $region32
        $region31: #{tpu_custom_call.1} parent=23 // pred_region
          %122 = vsyncadd %s114, 0
          %s123 = smul.addr %s16, 8
          %s124 = scalar_lea.hbm %s1, %s123
          %s126 = sshll.u32 %s117, 4
          %s127 = int_to_ptr.vmem [resolvable:$true] %s126
          %s128 = sshll.u32 %s124, 4
          %s129 = int_to_ptr.hbm [resolvable:$true] %s128
          %131 = dma.vmem_to_hbm [thread:$0]  %s127, 128, %s129, %s114
        $region32: #{tpu_custom_call.1} parent=23 // pred_fallthru
          _
      $region24: #{tpu_custom_call.1} parent=5 // pred_fallthru
        _
      %p132 = scmp.le.s32.totalorder 2, %s11
      // Predicated region
      $region33: #{tpu_custom_call.1} parent=5 // pred_check
        %p133 = pneg %p132
      $region34: #{tpu_custom_call.1} parent=5 // pred_check_branch
        %135 = sbr.rel (%p133) target = $region36
      $region35: #{tpu_custom_call.1} parent=5 // pred_region
        %s136 = ssub.s32 %s11, 2
        // Predicated region
        $region37: #{tpu_custom_call.1} parent=35 // pred_check
          %p137 = pneg %p61
        $region38: #{tpu_custom_call.1} parent=35 // pred_check_branch
          %139 = sbr.rel (%p137) target = $region40
        $region39: #{tpu_custom_call.1} parent=35 // pred_region
          %s140 = sand.u32 %s46, 1
          %s141 = scalar_lea.sflag [#allocation4], %s140
          %s142 = sand.u32 %s46, 1
          %s143 = smul.addr %s142, 8
          %s144 = scalar_lea.vmem [#allocation5], %s143
          %146 = dma.done %s141, 128
        $region40: #{tpu_custom_call.1} parent=35 // pred_fallthru
          _
      $region36: #{tpu_custom_call.1} parent=5 // pred_fallthru
        _
    $region6: #{tpu_custom_call.1} parent=1 // loop_footer
      %s15 = sadd.s32 1, %s11
    $region7: #{tpu_custom_call.1} parent=1 // loop_footer_branch
      %10 = sbr.rel target = $region3
    $region8: #{tpu_custom_call.1} parent=1 // loop_exit
      _
    %147 = vsyncpa [#allocation3], 1
    %s148 = scalar_lea.sflag [#allocation3], 1
    %149 = vsyncpa %s148, 1
    %150 = vsyncpa [#allocation4], 1
    %s151 = scalar_lea.sflag [#allocation4], 1
    %152 = vsyncpa %s151, 1

// kernel: point_encoder_forward.1
$region0: #{point_encoder_forward.1}
  #allocation0 [shape = 'u32[]', space=smem, size = 0x4, offset = 0x4, fixed_abs, tag = 'smem constant byte address 0x4 - core index']
  #allocation1 [shape = 'u32[72,128]{1,0:T(1,128)}', space=vmem, size = 0x9000, scoped, tag = 'internal scratch']
  %s0 = inlined_call_operand.vmem [shape: f32[64,16], index: 0, kind: input, shape index: {}]
  %s1 = inlined_call_operand.vmem [shape: f32[16,128], index: 1, kind: input, shape index: {}]
  %s2 = inlined_call_operand.vmem [shape: f32[1,128], index: 2, kind: input, shape index: {}]
  %s3 = inlined_call_operand.vmem [shape: f32[128,128], index: 3, kind: input, shape index: {}]
  %s4 = inlined_call_operand.vmem [shape: f32[4,1,128], index: 4, kind: input, shape index: {}]
  %s5 = inlined_call_operand.vmem [shape: f32[3,128,256], index: 5, kind: input, shape index: {}]
  %s6 = inlined_call_operand.vmem [shape: f32[4,128,128], index: 6, kind: input, shape index: {}]
  %s7 = inlined_call_operand.vmem [shape: f32[4,128,128], index: 7, kind: input, shape index: {}]
  %s8 = inlined_call_operand.vmem [shape: f32[4,1,128], index: 8, kind: input, shape index: {}]
  %s9 = inlined_call_operand.vmem [shape: f32[128,128], index: 9, kind: input, shape index: {}]
  %s10 = inlined_call_operand.vmem [shape: f32[1,128], index: 10, kind: input, shape index: {}]
  %s11 = inlined_call_operand.vmem [shape: f32[4,128], index: 11, kind: output, shape index: {}]
  %s12 = sld [smem:[#allocation0]]
  $region54: #{point_encoder_forward.1} parent=0
    _
  %s14 = ssub.s32 1, %s12
  %s15 = scalar_select 0, %s14, %s12
  // Predicated region
  $region2: #{point_encoder_forward.1} parent=0 // pred_check
    _
  $region3: #{point_encoder_forward.1} parent=0 // pred_check_branch
    %17 = sbr.rel (0) target = $region5
  $region4: #{point_encoder_forward.1} parent=0 // pred_region
    _
  $region5: #{point_encoder_forward.1} parent=0 // pred_fallthru
    _
  // Predicated region
  $region6: #{point_encoder_forward.1} parent=0 // pred_check
    _
  $region7: #{point_encoder_forward.1} parent=0 // pred_check_branch
    %19 = sbr.rel (0) target = $region9
  $region8: #{point_encoder_forward.1} parent=0 // pred_region
    _
  $region9: #{point_encoder_forward.1} parent=0 // pred_fallthru
    _
  // Predicated region
  $region10: #{point_encoder_forward.1} parent=0 // pred_check
    _
  $region11: #{point_encoder_forward.1} parent=0 // pred_check_branch
    %21 = sbr.rel (0) target = $region13
  $region12: #{point_encoder_forward.1} parent=0 // pred_region
    _
  $region13: #{point_encoder_forward.1} parent=0 // pred_fallthru
    _
  // Predicated region
  $region14: #{point_encoder_forward.1} parent=0 // pred_check
    _
  $region15: #{point_encoder_forward.1} parent=0 // pred_check_branch
    %23 = sbr.rel (0) target = $region17
  $region16: #{point_encoder_forward.1} parent=0 // pred_region
    _
  $region17: #{point_encoder_forward.1} parent=0 // pred_fallthru
    _
  // Predicated region
  $region18: #{point_encoder_forward.1} parent=0 // pred_check
    _
  $region19: #{point_encoder_forward.1} parent=0 // pred_check_branch
    %25 = sbr.rel (0) target = $region21
  $region20: #{point_encoder_forward.1} parent=0 // pred_region
    _
  $region21: #{point_encoder_forward.1} parent=0 // pred_fallthru
    _
  // Predicated region
  $region22: #{point_encoder_forward.1} parent=0 // pred_check
    _
  $region23: #{point_encoder_forward.1} parent=0 // pred_check_branch
    %27 = sbr.rel (0) target = $region25
  $region24: #{point_encoder_forward.1} parent=0 // pred_region
    _
  $region25: #{point_encoder_forward.1} parent=0 // pred_fallthru
    _
  // Predicated region
  $region26: #{point_encoder_forward.1} parent=0 // pred_check
    _
  $region27: #{point_encoder_forward.1} parent=0 // pred_check_branch
    %29 = sbr.rel (0) target = $region29
  $region28: #{point_encoder_forward.1} parent=0 // pred_region
    _
  $region29: #{point_encoder_forward.1} parent=0 // pred_fallthru
    _
  // Predicated region
  $region30: #{point_encoder_forward.1} parent=0 // pred_check
    _
  $region31: #{point_encoder_forward.1} parent=0 // pred_check_branch
    %31 = sbr.rel (0) target = $region33
  $region32: #{point_encoder_forward.1} parent=0 // pred_region
    _
  $region33: #{point_encoder_forward.1} parent=0 // pred_fallthru
    _
  // Predicated region
  $region34: #{point_encoder_forward.1} parent=0 // pred_check
    _
  $region35: #{point_encoder_forward.1} parent=0 // pred_check_branch
    %33 = sbr.rel (0) target = $region37
  $region36: #{point_encoder_forward.1} parent=0 // pred_region
    _
  $region37: #{point_encoder_forward.1} parent=0 // pred_fallthru
    _
  // Predicated region
  $region38: #{point_encoder_forward.1} parent=0 // pred_check
    _
  $region39: #{point_encoder_forward.1} parent=0 // pred_check_branch
    %35 = sbr.rel (0) target = $region41
  $region40: #{point_encoder_forward.1} parent=0 // pred_region
    _
  $region41: #{point_encoder_forward.1} parent=0 // pred_fallthru
    _
  // Predicated region
  $region42: #{point_encoder_forward.1} parent=0 // pred_check
    _
  $region43: #{point_encoder_forward.1} parent=0 // pred_check_branch
    %37 = sbr.rel (0) target = $region45
  $region44: #{point_encoder_forward.1} parent=0 // pred_region
    _
  $region45: #{point_encoder_forward.1} parent=0 // pred_fallthru
    _
  %v38 = vld [vmem:[%s0] sm:$0xff]
  %v39 = vld [vmem:[%s0 + $0x8] sm:$0xff]
  %v40 = vld [vmem:[%s0 + $0x10] sm:$0xff]
  %v41 = vld [vmem:[%s0 + $0x18] sm:$0xff]
  %v42 = vld [vmem:[%s0 + $0x20] sm:$0xff]
  %v43 = vld [vmem:[%s0 + $0x28] sm:$0xff]
  %v44 = vld [vmem:[%s0 + $0x30] sm:$0xff]
  %v45 = vld [vmem:[%s0 + $0x38] sm:$0xff]
  %v46 = vld [vmem:[%s1] sm:$0xff]
  %v47 = vld [vmem:[%s1 + $0x8] sm:$0xff]
  %v48 = vld [vmem:[%s2] sm:$0x1]
  %v50 = vperm.slane %v48, 0
  %vm52 = vcmask 130048
  %v54 = vsel %vm52, %v38, 0
  %v57 = vsel %vm52, %v39, 0
  %v60 = vsel %vm52, %v40, 0
  %v63 = vsel %vm52, %v41, 0
  %v66 = vsel %vm52, %v42, 0
  %v69 = vsel %vm52, %v43, 0
  %v72 = vsel %vm52, %v44, 0
  %v75 = vsel %vm52, %v45, 0
  %77 = vmatpush.msra.mxu0 0.0
  %78 = vmatpush.msra.mxu0 0.0
  %79 = vmatpush.msra.mxu0 0.0
  %80 = vmatpush.msra.mxu0 0.0
  %81 = vmatpush.msra.mxu0 0.0
  %82 = vmatpush.msra.mxu0 0.0
  %83 = vmatpush.msra.mxu0 0.0
  %84 = vmatpush.msra.mxu0 0.0
  %85 = vmatpush.msra.mxu0 0.0
  %86 = vmatpush.msra.mxu0 0.0
  %87 = vmatpush.msra.mxu0 0.0
  %88 = vmatpush.msra.mxu0 0.0
  %89 = vmatpush.msra.mxu0 0.0
  %90 = vmatpush.msra.mxu0 0.0
  %91 = vmatpush.msra.mxu0 %v47
  %92 = vmatpush.msra.mxu0 %v46
  %93 = vmatmul.f32.gmra.mxu0 %v54
  %v94 = vpop.f32.mrf.mxu0
  %v95 = vadd.f32 %v50, %v94
  %96 = vmatmul.f32.gmra.mxu0 %v57
  %v97 = vpop.f32.mrf.mxu0
  %v98 = vadd.f32 %v50, %v97
  %99 = vmatmul.f32.gmra.mxu0 %v60
  %v100 = vpop.f32.mrf.mxu0
  %v101 = vadd.f32 %v50, %v100
  %102 = vmatmul.f32.gmra.mxu0 %v63
  %v103 = vpop.f32.mrf.mxu0
  %v104 = vadd.f32 %v50, %v103
  %105 = vmatmul.f32.gmra.mxu0 %v66
  %v106 = vpop.f32.mrf.mxu0
  %v107 = vadd.f32 %v50, %v106
  %108 = vmatmul.f32.gmra.mxu0 %v69
  %v109 = vpop.f32.mrf.mxu0
  %v110 = vadd.f32 %v50, %v109
  %111 = vmatmul.f32.gmra.mxu0 %v72
  %v112 = vpop.f32.mrf.mxu0
  %v113 = vadd.f32 %v50, %v112
  %114 = vmatmul.f32.gmra.mxu0 %v75
  %v115 = vpop.f32.mrf.mxu0
  %v116 = vadd.f32 %v50, %v115
  %117 = vdwg.mxu0
  %v118 = vmax.f32 %v95, 0.0
  %v119 = vmax.f32 %v98, 0.0
  %v120 = vmax.f32 %v101, 0.0
  %v121 = vmax.f32 %v104, 0.0
  %v122 = vmax.f32 %v107, 0.0
  %v123 = vmax.f32 %v110, 0.0
  %v124 = vmax.f32 %v113, 0.0
  %v125 = vmax.f32 %v116, 0.0
  %v126 = vld [vmem:[%s3] sm:$0xff]
  %v127 = vld [vmem:[%s3 + $0x8] sm:$0xff]
  %v128 = vld [vmem:[%s3 + $0x10] sm:$0xff]
  %v129 = vld [vmem:[%s3 + $0x18] sm:$0xff]
  %v130 = vld [vmem:[%s3 + $0x20] sm:$0xff]
  %v131 = vld [vmem:[%s3 + $0x28] sm:$0xff]
  %v132 = vld [vmem:[%s3 + $0x30] sm:$0xff]
  %v133 = vld [vmem:[%s3 + $0x38] sm:$0xff]
  %v134 = vld [vmem:[%s3 + $0x40] sm:$0xff]
  %v135 = vld [vmem:[%s3 + $0x48] sm:$0xff]
  %v136 = vld [vmem:[%s3 + $0x50] sm:$0xff]
  %v137 = vld [vmem:[%s3 + $0x58] sm:$0xff]
  %v138 = vld [vmem:[%s3 + $0x60] sm:$0xff]
  %v139 = vld [vmem:[%s3 + $0x68] sm:$0xff]
  %v140 = vld [vmem:[%s3 + $0x70] sm:$0xff]
  %v141 = vld [vmem:[%s3 + $0x78] sm:$0xff]
  %v142 = vld [vmem:[%s4] sm:$0x1]
  %v144 = vperm.slane %v142, 0
  %146 = vmatpush.msra.mxu0 %v141
  %147 = vmatpush.msra.mxu0 %v140
  %148 = vmatpush.msra.mxu0 %v139
  %149 = vmatpush.msra.mxu0 %v138
  %150 = vmatpush.msra.mxu0 %v137
  %151 = vmatpush.msra.mxu0 %v136
  %152 = vmatpush.msra.mxu0 %v135
  %153 = vmatpush.msra.mxu0 %v134
  %154 = vmatpush.msra.mxu0 %v133
  %155 = vmatpush.msra.mxu0 %v132
  %156 = vmatpush.msra.mxu0 %v131
  %157 = vmatpush.msra.mxu0 %v130
  %158 = vmatpush.msra.mxu0 %v129
  %159 = vmatpush.msra.mxu0 %v128
  %160 = vmatpush.msra.mxu0 %v127
  %161 = vmatpush.msra.mxu0 %v126
  %162 = vmatmul.f32.gmra.mxu0 %v118
  %v163 = vpop.f32.mrf.mxu0
  %v164 = vadd.f32 %v144, %v163
  %165 = vmatmul.f32.gmra.mxu0 %v119
  %v166 = vpop.f32.mrf.mxu0
  %v167 = vadd.f32 %v144, %v166
  %168 = vmatmul.f32.gmra.mxu0 %v120
  %v169 = vpop.f32.mrf.mxu0
  %v170 = vadd.f32 %v144, %v169
  %171 = vmatmul.f32.gmra.mxu0 %v121
  %v172 = vpop.f32.mrf.mxu0
  %v173 = vadd.f32 %v144, %v172
  %174 = vmatmul.f32.gmra.mxu0 %v122
  %v175 = vpop.f32.mrf.mxu0
  %v176 = vadd.f32 %v144, %v175
  %177 = vmatmul.f32.gmra.mxu0 %v123
  %v178 = vpop.f32.mrf.mxu0
  %v179 = vadd.f32 %v144, %v178
  %180 = vmatmul.f32.gmra.mxu0 %v124
  %v181 = vpop.f32.mrf.mxu0
  %v182 = vadd.f32 %v144, %v181
  %183 = vmatmul.f32.gmra.mxu0 %v125
  %v184 = vpop.f32.mrf.mxu0
  %v185 = vadd.f32 %v144, %v184
  %186 = vdwg.mxu0
  %v187 = vmax.f32 %v164, 0.0
  %v188 = vmax.f32 %v167, 0.0
  %v189 = vmax.f32 %v170, 0.0
  %v190 = vmax.f32 %v173, 0.0
  %v191 = vmax.f32 %v176, 0.0
  %v192 = vmax.f32 %v179, 0.0
  %v193 = vmax.f32 %v182, 0.0
  %v194 = vmax.f32 %v185, 0.0
  %v195 = vmax.f32 %v187, %v188
  %v196 = vrot.slane %v195, 4
  %v197 = vmax.f32 %v195, %v196
  %v198 = vrot.slane %v197, 2
  %v199 = vmax.f32 %v197, %v198
  %v200 = vrot.slane %v199, 1
  %v201 = vmax.f32 %v199, %v200
  %v202 = vmax.f32 %v189, %v190
  %v203 = vrot.slane %v202, 4
  %v204 = vmax.f32 %v202, %v203
  %v205 = vrot.slane %v204, 2
  %v206 = vmax.f32 %v204, %v205
  %v207 = vrot.slane %v206, 1
  %v208 = vmax.f32 %v206, %v207
  %v209 = vmax.f32 %v191, %v192
  %v210 = vrot.slane %v209, 4
  %v211 = vmax.f32 %v209, %v210
  %v212 = vrot.slane %v211, 2
  %v213 = vmax.f32 %v211, %v212
  %v214 = vrot.slane %v213, 1
  %v215 = vmax.f32 %v213, %v214
  %v216 = vmax.f32 %v193, %v194
  %v217 = vrot.slane %v216, 4
  %v218 = vmax.f32 %v216, %v217
  %v219 = vrot.slane %v218, 2
  %v220 = vmax.f32 %v218, %v219
  %v221 = vrot.slane %v220, 1
  %v222 = vmax.f32 %v220, %v221
  %v223 = vld [vmem:[%s7] sm:$0xff]
  %v224 = vld [vmem:[%s7 + $0x8] sm:$0xff]
  %v225 = vld [vmem:[%s7 + $0x10] sm:$0xff]
  %v226 = vld [vmem:[%s7 + $0x18] sm:$0xff]
  %v227 = vld [vmem:[%s7 + $0x20] sm:$0xff]
  %v228 = vld [vmem:[%s7 + $0x28] sm:$0xff]
  %v229 = vld [vmem:[%s7 + $0x30] sm:$0xff]
  %v230 = vld [vmem:[%s7 + $0x38] sm:$0xff]
  %v231 = vld [vmem:[%s7 + $0x40] sm:$0xff]
  %v232 = vld [vmem:[%s7 + $0x48] sm:$0xff]
  %v233 = vld [vmem:[%s7 + $0x50] sm:$0xff]
  %v234 = vld [vmem:[%s7 + $0x58] sm:$0xff]
  %v235 = vld [vmem:[%s7 + $0x60] sm:$0xff]
  %v236 = vld [vmem:[%s7 + $0x68] sm:$0xff]
  %v237 = vld [vmem:[%s7 + $0x70] sm:$0xff]
  %v238 = vld [vmem:[%s7 + $0x78] sm:$0xff]
  %v239 = vld [vmem:[%s8] sm:$0x1]
  %v241 = vperm.slane %v239, 0
  %vm247 = vcmask 1041409
  %v248 = vsel %vm247, %v208, %v201
  %vm249 = vcmask 1042434
  %v250 = vsel %vm249, %v215, %v248
  %vm251 = vcmask 1043459
  %v252 = vsel %vm251, %v222, %v250
  %254 = vmatpush.msra.mxu0 %v238
  %255 = vmatpush.msra.mxu0 %v237
  %256 = vmatpush.msra.mxu0 %v236
  %257 = vmatpush.msra.mxu0 %v235
  %258 = vmatpush.msra.mxu0 %v234
  %259 = vmatpush.msra.mxu0 %v233
  %260 = vmatpush.msra.mxu0 %v232
  %261 = vmatpush.msra.mxu0 %v231
  %262 = vmatpush.msra.mxu0 %v230
  %263 = vmatpush.msra.mxu0 %v229
  %264 = vmatpush.msra.mxu0 %v228
  %265 = vmatpush.msra.mxu0 %v227
  %266 = vmatpush.msra.mxu0 %v226
  %267 = vmatpush.msra.mxu0 %v225
  %268 = vmatpush.msra.mxu0 %v224
  %269 = vmatpush.msra.mxu0 %v223
  %270 = vmatmul.f32.gmra.mxu0 %v252
  %v271 = vpop.f32.mrf.mxu0
  %v272 = vadd.f32 %v241, %v271
  %273 = vdwg.mxu0
  %v275 = vrot.slane %v272, 1
  %v276 = vrot.slane %v272, 2
  %v277 = vrot.slane %v272, 3
  %v278 = vperm.slane %v272, 0
  %v279 = vperm.slane %v275, 0
  %v280 = vperm.slane %v276, 0
  %v281 = vperm.slane %v277, 0
  %v286 = vld [vmem:[%s6] sm:$0xff]
  %v287 = vld [vmem:[%s6 + $0x8] sm:$0xff]
  %v288 = vld [vmem:[%s6 + $0x10] sm:$0xff]
  %v289 = vld [vmem:[%s6 + $0x18] sm:$0xff]
  %v290 = vld [vmem:[%s6 + $0x20] sm:$0xff]
  %v291 = vld [vmem:[%s6 + $0x28] sm:$0xff]
  %v292 = vld [vmem:[%s6 + $0x30] sm:$0xff]
  %v293 = vld [vmem:[%s6 + $0x38] sm:$0xff]
  %v294 = vld [vmem:[%s6 + $0x40] sm:$0xff]
  %v295 = vld [vmem:[%s6 + $0x48] sm:$0xff]
  %v296 = vld [vmem:[%s6 + $0x50] sm:$0xff]
  %v297 = vld [vmem:[%s6 + $0x58] sm:$0xff]
  %v298 = vld [vmem:[%s6 + $0x60] sm:$0xff]
  %v299 = vld [vmem:[%s6 + $0x68] sm:$0xff]
  %v300 = vld [vmem:[%s6 + $0x70] sm:$0xff]
  %v301 = vld [vmem:[%s6 + $0x78] sm:$0xff]
  %302 = vmatpush.msra.mxu0 %v301
  %303 = vmatpush.msra.mxu0 %v300
  %304 = vmatpush.msra.mxu0 %v299
  %305 = vmatpush.msra.mxu0 %v298
  %306 = vmatpush.msra.mxu0 %v297
  %307 = vmatpush.msra.mxu0 %v296
  %308 = vmatpush.msra.mxu0 %v295
  %309 = vmatpush.msra.mxu0 %v294
  %310 = vmatpush.msra.mxu0 %v293
  %311 = vmatpush.msra.mxu0 %v292
  %312 = vmatpush.msra.mxu0 %v291
  %313 = vmatpush.msra.mxu0 %v290
  %314 = vmatpush.msra.mxu0 %v289
  %315 = vmatpush.msra.mxu0 %v288
  %316 = vmatpush.msra.mxu0 %v287
  %317 = vmatpush.msra.mxu0 %v286
  %318 = vmatmul.f32.gmra.mxu0 %v187
  %v319 = vpop.f32.mrf.mxu0
  %v320 = vadd.f32 %v278, %v319
  %321 = vmatmul.f32.gmra.mxu0 %v188
  %v322 = vpop.f32.mrf.mxu0
  %v323 = vadd.f32 %v278, %v322
  %324 = vmatmul.f32.gmra.mxu0 %v189
  %v325 = vpop.f32.mrf.mxu0
  %v326 = vadd.f32 %v279, %v325
  %327 = vmatmul.f32.gmra.mxu0 %v190
  %v328 = vpop.f32.mrf.mxu0
  %v329 = vadd.f32 %v279, %v328
  %330 = vmatmul.f32.gmra.mxu0 %v191
  %v331 = vpop.f32.mrf.mxu0
  %v332 = vadd.f32 %v280, %v331
  %333 = vmatmul.f32.gmra.mxu0 %v192
  %v334 = vpop.f32.mrf.mxu0
  %v335 = vadd.f32 %v280, %v334
  %336 = vmatmul.f32.gmra.mxu0 %v193
  %v337 = vpop.f32.mrf.mxu0
  %v338 = vadd.f32 %v281, %v337
  %339 = vmatmul.f32.gmra.mxu0 %v194
  %v340 = vpop.f32.mrf.mxu0
  %v341 = vadd.f32 %v281, %v340
  %342 = vdwg.mxu0
  %v343 = vmax.f32 %v320, 0.0
  %v344 = vmax.f32 %v323, 0.0
  %v345 = vmax.f32 %v326, 0.0
  %v346 = vmax.f32 %v329, 0.0
  %v347 = vmax.f32 %v332, 0.0
  %v348 = vmax.f32 %v335, 0.0
  %v349 = vmax.f32 %v338, 0.0
  %v350 = vmax.f32 %v341, 0.0
  %v351 = vld [vmem:[%s5] sm:$0xff]
  %v352 = vld [vmem:[%s5 + $0x8] sm:$0xff]
  %v353 = vld [vmem:[%s5 + $0x10] sm:$0xff]
  %v354 = vld [vmem:[%s5 + $0x18] sm:$0xff]
  %v355 = vld [vmem:[%s5 + $0x20] sm:$0xff]
  %v356 = vld [vmem:[%s5 + $0x28] sm:$0xff]
  %v357 = vld [vmem:[%s5 + $0x30] sm:$0xff]
  %v358 = vld [vmem:[%s5 + $0x38] sm:$0xff]
  %v359 = vld [vmem:[%s5 + $0x40] sm:$0xff]
  %v360 = vld [vmem:[%s5 + $0x48] sm:$0xff]
  %v361 = vld [vmem:[%s5 + $0x50] sm:$0xff]
  %v362 = vld [vmem:[%s5 + $0x58] sm:$0xff]
  %v363 = vld [vmem:[%s5 + $0x60] sm:$0xff]
  %v364 = vld [vmem:[%s5 + $0x68] sm:$0xff]
  %v365 = vld [vmem:[%s5 + $0x70] sm:$0xff]
  %v366 = vld [vmem:[%s5 + $0x78] sm:$0xff]
  %v367 = vld [vmem:[%s5 + $0x80] sm:$0xff]
  %v368 = vld [vmem:[%s5 + $0x88] sm:$0xff]
  %v369 = vld [vmem:[%s5 + $0x90] sm:$0xff]
  %v370 = vld [vmem:[%s5 + $0x98] sm:$0xff]
  %v371 = vld [vmem:[%s5 + $0xa0] sm:$0xff]
  %v372 = vld [vmem:[%s5 + $0xa8] sm:$0xff]
  %v373 = vld [vmem:[%s5 + $0xb0] sm:$0xff]
  %v374 = vld [vmem:[%s5 + $0xb8] sm:$0xff]
  %v375 = vld [vmem:[%s5 + $0xc0] sm:$0xff]
  %v376 = vld [vmem:[%s5 + $0xc8] sm:$0xff]
  %v377 = vld [vmem:[%s5 + $0xd0] sm:$0xff]
  %v378 = vld [vmem:[%s5 + $0xd8] sm:$0xff]
  %v379 = vld [vmem:[%s5 + $0xe0] sm:$0xff]
  %v380 = vld [vmem:[%s5 + $0xe8] sm:$0xff]
  %v381 = vld [vmem:[%s5 + $0xf0] sm:$0xff]
  %v382 = vld [vmem:[%s5 + $0xf8] sm:$0xff]
  %383 = vmatpush.msra.mxu0 %v381
  %384 = vmatpush.msra.mxu0 %v379
  %385 = vmatpush.msra.mxu0 %v377
  %386 = vmatpush.msra.mxu0 %v375
  %387 = vmatpush.msra.mxu0 %v373
  %388 = vmatpush.msra.mxu0 %v371
  %389 = vmatpush.msra.mxu0 %v369
  %390 = vmatpush.msra.mxu0 %v367
  %391 = vmatpush.msra.mxu0 %v365
  %392 = vmatpush.msra.mxu0 %v363
  %393 = vmatpush.msra.mxu0 %v361
  %394 = vmatpush.msra.mxu0 %v359
  %395 = vmatpush.msra.mxu0 %v357
  %396 = vmatpush.msra.mxu0 %v355
  %397 = vmatpush.msra.mxu0 %v353
  %398 = vmatpush.msra.mxu0 %v351
  %399 = vmatmul.f32.gmra.mxu0 %v343
  %v400 = vpop.f32.mrf.mxu0
  %v401 = vadd.f32 0.0, %v400
  %402 = vmatmul.f32.gmra.mxu0 %v344
  %v403 = vpop.f32.mrf.mxu0
  %v404 = vadd.f32 0.0, %v403
  %405 = vmatmul.f32.gmra.mxu0 %v345
  %v406 = vpop.f32.mrf.mxu0
  %v407 = vadd.f32 0.0, %v406
  %408 = vmatmul.f32.gmra.mxu0 %v346
  %v409 = vpop.f32.mrf.mxu0
  %v410 = vadd.f32 0.0, %v409
  %411 = vmatmul.f32.gmra.mxu0 %v347
  %v412 = vpop.f32.mrf.mxu0
  %v413 = vadd.f32 0.0, %v412
  %414 = vmatmul.f32.gmra.mxu0 %v348
  %v415 = vpop.f32.mrf.mxu0
  %v416 = vadd.f32 0.0, %v415
  %417 = vmatmul.f32.gmra.mxu0 %v349
  %v418 = vpop.f32.mrf.mxu0
  %v419 = vadd.f32 0.0, %v418
  %420 = vmatmul.f32.gmra.mxu0 %v350
  %v421 = vpop.f32.mrf.mxu0
  %v422 = vadd.f32 0.0, %v421
  %423 = vdwg.mxu0
  %424 = vmatpush.msra.mxu0 %v382
  %425 = vmatpush.msra.mxu0 %v380
  %426 = vmatpush.msra.mxu0 %v378
  %427 = vmatpush.msra.mxu0 %v376
  %428 = vmatpush.msra.mxu0 %v374
  %429 = vmatpush.msra.mxu0 %v372
  %430 = vmatpush.msra.mxu0 %v370
  %431 = vmatpush.msra.mxu0 %v368
  %432 = vmatpush.msra.mxu0 %v366
  %433 = vmatpush.msra.mxu0 %v364
  %434 = vmatpush.msra.mxu0 %v362
  %435 = vmatpush.msra.mxu0 %v360
  %436 = vmatpush.msra.mxu0 %v358
  %437 = vmatpush.msra.mxu0 %v356
  %438 = vmatpush.msra.mxu0 %v354
  %439 = vmatpush.msra.mxu0 %v352
  %440 = vmatmul.f32.gmra.mxu0 %v343
  %v441 = vpop.f32.mrf.mxu0
  %v442 = vadd.f32 0.0, %v441
  %443 = vmatmul.f32.gmra.mxu0 %v344
  %v444 = vpop.f32.mrf.mxu0
  %v445 = vadd.f32 0.0, %v444
  %446 = vmatmul.f32.gmra.mxu0 %v345
  %v447 = vpop.f32.mrf.mxu0
  %v448 = vadd.f32 0.0, %v447
  %449 = vmatmul.f32.gmra.mxu0 %v346
  %v450 = vpop.f32.mrf.mxu0
  %v451 = vadd.f32 0.0, %v450
  %452 = vmatmul.f32.gmra.mxu0 %v347
  %v453 = vpop.f32.mrf.mxu0
  %v454 = vadd.f32 0.0, %v453
  %455 = vmatmul.f32.gmra.mxu0 %v348
  %v456 = vpop.f32.mrf.mxu0
  %v457 = vadd.f32 0.0, %v456
  %458 = vmatmul.f32.gmra.mxu0 %v349
  %v459 = vpop.f32.mrf.mxu0
  %v460 = vadd.f32 0.0, %v459
  %461 = vmatmul.f32.gmra.mxu0 %v350
  %v462 = vpop.f32.mrf.mxu0
  %v463 = vadd.f32 0.0, %v462
  %464 = vdwg.mxu0
  %v465 = vadd.f32 %v442, 0.0
  %v466 = vadd.f32 %v445, 0.0
  %v467 = vadd.f32 %v448, 0.0
  %v468 = vadd.f32 %v451, 0.0
  %v469 = vadd.f32 %v454, 0.0
  %v470 = vadd.f32 %v457, 0.0
  %v471 = vadd.f32 %v460, 0.0
  %v472 = vadd.f32 %v463, 0.0
  %s473 = scalar_lea.vmem %s4, 1
  %v474 = vld [vmem:[%s473] sm:$0x1]
  %v476 = vperm.slane %v474, 0
  %v478 = vadd.f32 %v401, %v476
  %v479 = vadd.f32 %v404, %v476
  %v480 = vadd.f32 %v407, %v476
  %v481 = vadd.f32 %v410, %v476
  %v482 = vadd.f32 %v413, %v476
  %v483 = vadd.f32 %v416, %v476
  %v484 = vadd.f32 %v419, %v476
  %v485 = vadd.f32 %v422, %v476
  %v486 = vmax.f32 %v478, 0.0
  %v487 = vmax.f32 %v479, 0.0
  %v488 = vmax.f32 %v480, 0.0
  %v489 = vmax.f32 %v481, 0.0
  %v490 = vmax.f32 %v482, 0.0
  %v491 = vmax.f32 %v483, 0.0
  %v492 = vmax.f32 %v484, 0.0
  %v493 = vmax.f32 %v485, 0.0
  %v494 = vmax.f32 %v486, %v487
  %v495 = vrot.slane %v494, 4
  %v496 = vmax.f32 %v494, %v495
  %v497 = vrot.slane %v496, 2
  %v498 = vmax.f32 %v496, %v497
  %v499 = vrot.slane %v498, 1
  %v500 = vmax.f32 %v498, %v499
  %v501 = vmax.f32 %v488, %v489
  %v502 = vrot.slane %v501, 4
  %v503 = vmax.f32 %v501, %v502
  %v504 = vrot.slane %v503, 2
  %v505 = vmax.f32 %v503, %v504
  %v506 = vrot.slane %v505, 1
  %v507 = vmax.f32 %v505, %v506
  %v508 = vmax.f32 %v490, %v491
  %v509 = vrot.slane %v508, 4
  %v510 = vmax.f32 %v508, %v509
  %v511 = vrot.slane %v510, 2
  %v512 = vmax.f32 %v510, %v511
  %v513 = vrot.slane %v512, 1
  %v514 = vmax.f32 %v512, %v513
  %v515 = vmax.f32 %v492, %v493
  %v516 = vrot.slane %v515, 4
  %v517 = vmax.f32 %v515, %v516
  %v518 = vrot.slane %v517, 2
  %v519 = vmax.f32 %v517, %v518
  %v520 = vrot.slane %v519, 1
  %v521 = vmax.f32 %v519, %v520
  %s522 = scalar_lea.vmem %s7, 128
  %v523 = vld [vmem:[%s522] sm:$0xff]
  %v524 = vld [vmem:[%s522 + $0x8] sm:$0xff]
  %v525 = vld [vmem:[%s522 + $0x10] sm:$0xff]
  %v526 = vld [vmem:[%s522 + $0x18] sm:$0xff]
  %v527 = vld [vmem:[%s522 + $0x20] sm:$0xff]
  %v528 = vld [vmem:[%s522 + $0x28] sm:$0xff]
  %v529 = vld [vmem:[%s522 + $0x30] sm:$0xff]
  %v530 = vld [vmem:[%s522 + $0x38] sm:$0xff]
  %v531 = vld [vmem:[%s522 + $0x40] sm:$0xff]
  %v532 = vld [vmem:[%s522 + $0x48] sm:$0xff]
  %v533 = vld [vmem:[%s522 + $0x50] sm:$0xff]
  %v534 = vld [vmem:[%s522 + $0x58] sm:$0xff]
  %v535 = vld [vmem:[%s522 + $0x60] sm:$0xff]
  %v536 = vld [vmem:[%s522 + $0x68] sm:$0xff]
  %v537 = vld [vmem:[%s522 + $0x70] sm:$0xff]
  %v538 = vld [vmem:[%s522 + $0x78] sm:$0xff]
  %s539 = scalar_lea.vmem %s8, 1
  %v540 = vld [vmem:[%s539] sm:$0x1]
  %v542 = vperm.slane %v540, 0
  %v548 = vsel %vm247, %v507, %v500
  %v549 = vsel %vm249, %v514, %v548
  %v550 = vsel %vm251, %v521, %v549
  %552 = vmatpush.msra.mxu0 %v538
  %553 = vmatpush.msra.mxu0 %v537
  %554 = vmatpush.msra.mxu0 %v536
  %555 = vmatpush.msra.mxu0 %v535
  %556 = vmatpush.msra.mxu0 %v534
  %557 = vmatpush.msra.mxu0 %v533
  %558 = vmatpush.msra.mxu0 %v532
  %559 = vmatpush.msra.mxu0 %v531
  %560 = vmatpush.msra.mxu0 %v530
  %561 = vmatpush.msra.mxu0 %v529
  %562 = vmatpush.msra.mxu0 %v528
  %563 = vmatpush.msra.mxu0 %v527
  %564 = vmatpush.msra.mxu0 %v526
  %565 = vmatpush.msra.mxu0 %v525
  %566 = vmatpush.msra.mxu0 %v524
  %567 = vmatpush.msra.mxu0 %v523
  %568 = vmatmul.f32.gmra.mxu0 %v550
  %v569 = vpop.f32.mrf.mxu0
  %v570 = vadd.f32 %v542, %v569
  %571 = vdwg.mxu0
  %v573 = vrot.slane %v570, 1
  %v574 = vrot.slane %v570, 2
  %v575 = vrot.slane %v570, 3
  %v576 = vperm.slane %v570, 0
  %v577 = vperm.slane %v573, 0
  %v578 = vperm.slane %v574, 0
  %v579 = vperm.slane %v575, 0
  %s584 = scalar_lea.vmem %s6, 128
  %v585 = vld [vmem:[%s584] sm:$0xff]
  %v586 = vld [vmem:[%s584 + $0x8] sm:$0xff]
  %v587 = vld [vmem:[%s584 + $0x10] sm:$0xff]
  %v588 = vld [vmem:[%s584 + $0x18] sm:$0xff]
  %v589 = vld [vmem:[%s584 + $0x20] sm:$0xff]
  %v590 = vld [vmem:[%s584 + $0x28] sm:$0xff]
  %v591 = vld [vmem:[%s584 + $0x30] sm:$0xff]
  %v592 = vld [vmem:[%s584 + $0x38] sm:$0xff]
  %v593 = vld [vmem:[%s584 + $0x40] sm:$0xff]
  %v594 = vld [vmem:[%s584 + $0x48] sm:$0xff]
  %v595 = vld [vmem:[%s584 + $0x50] sm:$0xff]
  %v596 = vld [vmem:[%s584 + $0x58] sm:$0xff]
  %v597 = vld [vmem:[%s584 + $0x60] sm:$0xff]
  %v598 = vld [vmem:[%s584 + $0x68] sm:$0xff]
  %v599 = vld [vmem:[%s584 + $0x70] sm:$0xff]
  %v600 = vld [vmem:[%s584 + $0x78] sm:$0xff]
  %601 = vmatpush.msra.mxu0 %v600
  %602 = vmatpush.msra.mxu0 %v599
  %603 = vmatpush.msra.mxu0 %v598
  %604 = vmatpush.msra.mxu0 %v597
  %605 = vmatpush.msra.mxu0 %v596
  %606 = vmatpush.msra.mxu0 %v595
  %607 = vmatpush.msra.mxu0 %v594
  %608 = vmatpush.msra.mxu0 %v593
  %609 = vmatpush.msra.mxu0 %v592
  %610 = vmatpush.msra.mxu0 %v591
  %611 = vmatpush.msra.mxu0 %v590
  %612 = vmatpush.msra.mxu0 %v589
  %613 = vmatpush.msra.mxu0 %v588
  %614 = vmatpush.msra.mxu0 %v587
  %615 = vmatpush.msra.mxu0 %v586
  %616 = vmatpush.msra.mxu0 %v585
  %617 = vmatmul.f32.gmra.mxu0 %v486
  %v618 = vpop.f32.mrf.mxu0
  %v619 = vadd.f32 %v576, %v618
  %620 = vmatmul.f32.gmra.mxu0 %v487
  %v621 = vpop.f32.mrf.mxu0
  %v622 = vadd.f32 %v576, %v621
  %623 = vmatmul.f32.gmra.mxu0 %v488
  %v624 = vpop.f32.mrf.mxu0
  %v625 = vadd.f32 %v577, %v624
  %626 = vmatmul.f32.gmra.mxu0 %v489
  %v627 = vpop.f32.mrf.mxu0
  %v628 = vadd.f32 %v577, %v627
  %629 = vmatmul.f32.gmra.mxu0 %v490
  %v630 = vpop.f32.mrf.mxu0
  %v631 = vadd.f32 %v578, %v630
  %632 = vmatmul.f32.gmra.mxu0 %v491
  %v633 = vpop.f32.mrf.mxu0
  %v634 = vadd.f32 %v578, %v633
  %635 = vmatmul.f32.gmra.mxu0 %v492
  %v636 = vpop.f32.mrf.mxu0
  %v637 = vadd.f32 %v579, %v636
  %638 = vmatmul.f32.gmra.mxu0 %v493
  %v639 = vpop.f32.mrf.mxu0
  %v640 = vadd.f32 %v579, %v639
  %641 = vdwg.mxu0
  %v642 = vmax.f32 %v619, 0.0
  %v643 = vmax.f32 %v622, 0.0
  %v644 = vmax.f32 %v625, 0.0
  %v645 = vmax.f32 %v628, 0.0
  %v646 = vmax.f32 %v631, 0.0
  %v647 = vmax.f32 %v634, 0.0
  %v648 = vmax.f32 %v637, 0.0
  %v649 = vmax.f32 %v640, 0.0
  %s650 = scalar_lea.vmem %s5, 256
  %v651 = vld [vmem:[%s650] sm:$0xff]
  %v652 = vld [vmem:[%s650 + $0x8] sm:$0xff]
  %v653 = vld [vmem:[%s650 + $0x10] sm:$0xff]
  %v654 = vld [vmem:[%s650 + $0x18] sm:$0xff]
  %v655 = vld [vmem:[%s650 + $0x20] sm:$0xff]
  %v656 = vld [vmem:[%s650 + $0x28] sm:$0xff]
  %v657 = vld [vmem:[%s650 + $0x30] sm:$0xff]
  %v658 = vld [vmem:[%s650 + $0x38] sm:$0xff]
  %v659 = vld [vmem:[%s650 + $0x40] sm:$0xff]
  %v660 = vld [vmem:[%s650 + $0x48] sm:$0xff]
  %v661 = vld [vmem:[%s650 + $0x50] sm:$0xff]
  %v662 = vld [vmem:[%s650 + $0x58] sm:$0xff]
  %v663 = vld [vmem:[%s650 + $0x60] sm:$0xff]
  %v664 = vld [vmem:[%s650 + $0x68] sm:$0xff]
  %v665 = vld [vmem:[%s650 + $0x70] sm:$0xff]
  %v666 = vld [vmem:[%s650 + $0x78] sm:$0xff]
  %v667 = vld [vmem:[%s650 + $0x80] sm:$0xff]
  %v668 = vld [vmem:[%s650 + $0x88] sm:$0xff]
  %v669 = vld [vmem:[%s650 + $0x90] sm:$0xff]
  %v670 = vld [vmem:[%s650 + $0x98] sm:$0xff]
  %v671 = vld [vmem:[%s650 + $0xa0] sm:$0xff]
  %v672 = vld [vmem:[%s650 + $0xa8] sm:$0xff]
  %v673 = vld [vmem:[%s650 + $0xb0] sm:$0xff]
  %v674 = vld [vmem:[%s650 + $0xb8] sm:$0xff]
  %v675 = vld [vmem:[%s650 + $0xc0] sm:$0xff]
  %v676 = vld [vmem:[%s650 + $0xc8] sm:$0xff]
  %v677 = vld [vmem:[%s650 + $0xd0] sm:$0xff]
  %v678 = vld [vmem:[%s650 + $0xd8] sm:$0xff]
  %v679 = vld [vmem:[%s650 + $0xe0] sm:$0xff]
  %v680 = vld [vmem:[%s650 + $0xe8] sm:$0xff]
  %v681 = vld [vmem:[%s650 + $0xf0] sm:$0xff]
  %v682 = vld [vmem:[%s650 + $0xf8] sm:$0xff]
  %683 = vmatpush.msra.mxu0 %v681
  %684 = vmatpush.msra.mxu0 %v679
  %685 = vmatpush.msra.mxu0 %v677
  %686 = vmatpush.msra.mxu0 %v675
  %687 = vmatpush.msra.mxu0 %v673
  %688 = vmatpush.msra.mxu0 %v671
  %689 = vmatpush.msra.mxu0 %v669
  %690 = vmatpush.msra.mxu0 %v667
  %691 = vmatpush.msra.mxu0 %v665
  %692 = vmatpush.msra.mxu0 %v663
  %693 = vmatpush.msra.mxu0 %v661
  %694 = vmatpush.msra.mxu0 %v659
  %695 = vmatpush.msra.mxu0 %v657
  %696 = vmatpush.msra.mxu0 %v655
  %697 = vmatpush.msra.mxu0 %v653
  %698 = vmatpush.msra.mxu0 %v651
  %699 = vmatmul.f32.gmra.mxu0 %v642
  %v700 = vpop.f32.mrf.mxu0
  %v701 = vadd.f32 0.0, %v700
  %702 = vmatmul.f32.gmra.mxu0 %v643
  %v703 = vpop.f32.mrf.mxu0
  %v704 = vadd.f32 0.0, %v703
  %705 = vmatmul.f32.gmra.mxu0 %v644
  %v706 = vpop.f32.mrf.mxu0
  %v707 = vadd.f32 0.0, %v706
  %708 = vmatmul.f32.gmra.mxu0 %v645
  %v709 = vpop.f32.mrf.mxu0
  %v710 = vadd.f32 0.0, %v709
  %711 = vmatmul.f32.gmra.mxu0 %v646
  %v712 = vpop.f32.mrf.mxu0
  %v713 = vadd.f32 0.0, %v712
  %714 = vmatmul.f32.gmra.mxu0 %v647
  %v715 = vpop.f32.mrf.mxu0
  %v716 = vadd.f32 0.0, %v715
  %717 = vmatmul.f32.gmra.mxu0 %v648
  %v718 = vpop.f32.mrf.mxu0
  %v719 = vadd.f32 0.0, %v718
  %720 = vmatmul.f32.gmra.mxu0 %v649
  %v721 = vpop.f32.mrf.mxu0
  %v722 = vadd.f32 0.0, %v721
  %723 = vdwg.mxu0
  %724 = vmatpush.msra.mxu0 %v682
  %725 = vmatpush.msra.mxu0 %v680
  %726 = vmatpush.msra.mxu0 %v678
  %727 = vmatpush.msra.mxu0 %v676
  %728 = vmatpush.msra.mxu0 %v674
  %729 = vmatpush.msra.mxu0 %v672
  %730 = vmatpush.msra.mxu0 %v670
  %731 = vmatpush.msra.mxu0 %v668
  %732 = vmatpush.msra.mxu0 %v666
  %733 = vmatpush.msra.mxu0 %v664
  %734 = vmatpush.msra.mxu0 %v662
  %735 = vmatpush.msra.mxu0 %v660
  %736 = vmatpush.msra.mxu0 %v658
  %737 = vmatpush.msra.mxu0 %v656
  %738 = vmatpush.msra.mxu0 %v654
  %739 = vmatpush.msra.mxu0 %v652
  %740 = vmatmul.f32.gmra.mxu0 %v642
  %v741 = vpop.f32.mrf.mxu0
  %v742 = vadd.f32 0.0, %v741
  %743 = vmatmul.f32.gmra.mxu0 %v643
  %v744 = vpop.f32.mrf.mxu0
  %v745 = vadd.f32 0.0, %v744
  %746 = vmatmul.f32.gmra.mxu0 %v644
  %v747 = vpop.f32.mrf.mxu0
  %v748 = vadd.f32 0.0, %v747
  %749 = vmatmul.f32.gmra.mxu0 %v645
  %v750 = vpop.f32.mrf.mxu0
  %v751 = vadd.f32 0.0, %v750
  %752 = vmatmul.f32.gmra.mxu0 %v646
  %v753 = vpop.f32.mrf.mxu0
  %v754 = vadd.f32 0.0, %v753
  %755 = vmatmul.f32.gmra.mxu0 %v647
  %v756 = vpop.f32.mrf.mxu0
  %v757 = vadd.f32 0.0, %v756
  %758 = vmatmul.f32.gmra.mxu0 %v648
  %v759 = vpop.f32.mrf.mxu0
  %v760 = vadd.f32 0.0, %v759
  %761 = vmatmul.f32.gmra.mxu0 %v649
  %v762 = vpop.f32.mrf.mxu0
  %v763 = vadd.f32 0.0, %v762
  %764 = vdwg.mxu0
  %v765 = vadd.f32 %v465, %v742
  %v766 = vadd.f32 %v466, %v745
  %v767 = vadd.f32 %v467, %v748
  %v768 = vadd.f32 %v468, %v751
  %v769 = vadd.f32 %v469, %v754
  %v770 = vadd.f32 %v470, %v757
  %v771 = vadd.f32 %v471, %v760
  %v772 = vadd.f32 %v472, %v763
  %s773 = scalar_lea.vmem %s4, 2
  %v774 = vld [vmem:[%s773] sm:$0x1]
  %v776 = vperm.slane %v774, 0
  %v778 = vadd.f32 %v701, %v776
  %v779 = vadd.f32 %v704, %v776
  %v780 = vadd.f32 %v707, %v776
  %v781 = vadd.f32 %v710, %v776
  %v782 = vadd.f32 %v713, %v776
  %v783 = vadd.f32 %v716, %v776
  %v784 = vadd.f32 %v719, %v776
  %v785 = vadd.f32 %v722, %v776
  %v786 = vmax.f32 %v778, 0.0
  %v787 = vmax.f32 %v779, 0.0
  %v788 = vmax.f32 %v780, 0.0
  %v789 = vmax.f32 %v781, 0.0
  %v790 = vmax.f32 %v782, 0.0
  %v791 = vmax.f32 %v783, 0.0
  %v792 = vmax.f32 %v784, 0.0
  %v793 = vmax.f32 %v785, 0.0
  %v794 = vmax.f32 %v786, %v787
  %v795 = vrot.slane %v794, 4
  %v796 = vmax.f32 %v794, %v795
  %v797 = vrot.slane %v796, 2
  %v798 = vmax.f32 %v796, %v797
  %v799 = vrot.slane %v798, 1
  %v800 = vmax.f32 %v798, %v799
  %v801 = vmax.f32 %v788, %v789
  %v802 = vrot.slane %v801, 4
  %v803 = vmax.f32 %v801, %v802
  %v804 = vrot.slane %v803, 2
  %v805 = vmax.f32 %v803, %v804
  %v806 = vrot.slane %v805, 1
  %v807 = vmax.f32 %v805, %v806
  %v808 = vmax.f32 %v790, %v791
  %v809 = vrot.slane %v808, 4
  %v810 = vmax.f32 %v808, %v809
  %v811 = vrot.slane %v810, 2
  %v812 = vmax.f32 %v810, %v811
  %v813 = vrot.slane %v812, 1
  %v814 = vmax.f32 %v812, %v813
  %v815 = vmax.f32 %v792, %v793
  %v816 = vrot.slane %v815, 4
  %v817 = vmax.f32 %v815, %v816
  %v818 = vrot.slane %v817, 2
  %v819 = vmax.f32 %v817, %v818
  %v820 = vrot.slane %v819, 1
  %v821 = vmax.f32 %v819, %v820
  %s822 = scalar_lea.vmem %s7, 256
  %v823 = vld [vmem:[%s822] sm:$0xff]
  %v824 = vld [vmem:[%s822 + $0x8] sm:$0xff]
  %v825 = vld [vmem:[%s822 + $0x10] sm:$0xff]
  %v826 = vld [vmem:[%s822 + $0x18] sm:$0xff]
  %v827 = vld [vmem:[%s822 + $0x20] sm:$0xff]
  %v828 = vld [vmem:[%s822 + $0x28] sm:$0xff]
  %v829 = vld [vmem:[%s822 + $0x30] sm:$0xff]
  %v830 = vld [vmem:[%s822 + $0x38] sm:$0xff]
  %v831 = vld [vmem:[%s822 + $0x40] sm:$0xff]
  %v832 = vld [vmem:[%s822 + $0x48] sm:$0xff]
  %v833 = vld [vmem:[%s822 + $0x50] sm:$0xff]
  %v834 = vld [vmem:[%s822 + $0x58] sm:$0xff]
  %v835 = vld [vmem:[%s822 + $0x60] sm:$0xff]
  %v836 = vld [vmem:[%s822 + $0x68] sm:$0xff]
  %v837 = vld [vmem:[%s822 + $0x70] sm:$0xff]
  %v838 = vld [vmem:[%s822 + $0x78] sm:$0xff]
  %s839 = scalar_lea.vmem %s8, 2
  %v840 = vld [vmem:[%s839] sm:$0x1]
  %v842 = vperm.slane %v840, 0
  %v848 = vsel %vm247, %v807, %v800
  %v849 = vsel %vm249, %v814, %v848
  %v850 = vsel %vm251, %v821, %v849
  %852 = vmatpush.msra.mxu0 %v838
  %853 = vmatpush.msra.mxu0 %v837
  %854 = vmatpush.msra.mxu0 %v836
  %855 = vmatpush.msra.mxu0 %v835
  %856 = vmatpush.msra.mxu0 %v834
  %857 = vmatpush.msra.mxu0 %v833
  %858 = vmatpush.msra.mxu0 %v832
  %859 = vmatpush.msra.mxu0 %v831
  %860 = vmatpush.msra.mxu0 %v830
  %861 = vmatpush.msra.mxu0 %v829
  %862 = vmatpush.msra.mxu0 %v828
  %863 = vmatpush.msra.mxu0 %v827
  %864 = vmatpush.msra.mxu0 %v826
  %865 = vmatpush.msra.mxu0 %v825
  %866 = vmatpush.msra.mxu0 %v824
  %867 = vmatpush.msra.mxu0 %v823
  %868 = vmatmul.f32.gmra.mxu0 %v850
  %v869 = vpop.f32.mrf.mxu0
  %v870 = vadd.f32 %v842, %v869
  %871 = vdwg.mxu0
  %v873 = vrot.slane %v870, 1
  %v874 = vrot.slane %v870, 2
  %v875 = vrot.slane %v870, 3
  %v876 = vperm.slane %v870, 0
  %v877 = vperm.slane %v873, 0
  %v878 = vperm.slane %v874, 0
  %v879 = vperm.slane %v875, 0
  %s884 = scalar_lea.vmem %s6, 256
  %v885 = vld [vmem:[%s884] sm:$0xff]
  %v886 = vld [vmem:[%s884 + $0x8] sm:$0xff]
  %v887 = vld [vmem:[%s884 + $0x10] sm:$0xff]
  %v888 = vld [vmem:[%s884 + $0x18] sm:$0xff]
  %v889 = vld [vmem:[%s884 + $0x20] sm:$0xff]
  %v890 = vld [vmem:[%s884 + $0x28] sm:$0xff]
  %v891 = vld [vmem:[%s884 + $0x30] sm:$0xff]
  %v892 = vld [vmem:[%s884 + $0x38] sm:$0xff]
  %v893 = vld [vmem:[%s884 + $0x40] sm:$0xff]
  %v894 = vld [vmem:[%s884 + $0x48] sm:$0xff]
  %v895 = vld [vmem:[%s884 + $0x50] sm:$0xff]
  %v896 = vld [vmem:[%s884 + $0x58] sm:$0xff]
  %v897 = vld [vmem:[%s884 + $0x60] sm:$0xff]
  %v898 = vld [vmem:[%s884 + $0x68] sm:$0xff]
  %v899 = vld [vmem:[%s884 + $0x70] sm:$0xff]
  %v900 = vld [vmem:[%s884 + $0x78] sm:$0xff]
  %901 = vmatpush.msra.mxu0 %v900
  %902 = vmatpush.msra.mxu0 %v899
  %903 = vmatpush.msra.mxu0 %v898
  %904 = vmatpush.msra.mxu0 %v897
  %905 = vmatpush.msra.mxu0 %v896
  %906 = vmatpush.msra.mxu0 %v895
  %907 = vmatpush.msra.mxu0 %v894
  %908 = vmatpush.msra.mxu0 %v893
  %909 = vmatpush.msra.mxu0 %v892
  %910 = vmatpush.msra.mxu0 %v891
  %911 = vmatpush.msra.mxu0 %v890
  %912 = vmatpush.msra.mxu0 %v889
  %913 = vmatpush.msra.mxu0 %v888
  %914 = vmatpush.msra.mxu0 %v887
  %915 = vmatpush.msra.mxu0 %v886
  %916 = vmatpush.msra.mxu0 %v885
  %917 = vmatmul.f32.gmra.mxu0 %v786
  %v918 = vpop.f32.mrf.mxu0
  %v919 = vadd.f32 %v876, %v918
  %920 = vmatmul.f32.gmra.mxu0 %v787
  %v921 = vpop.f32.mrf.mxu0
  %v922 = vadd.f32 %v876, %v921
  %923 = vmatmul.f32.gmra.mxu0 %v788
  %v924 = vpop.f32.mrf.mxu0
  %v925 = vadd.f32 %v877, %v924
  %926 = vmatmul.f32.gmra.mxu0 %v789
  %v927 = vpop.f32.mrf.mxu0
  %v928 = vadd.f32 %v877, %v927
  %929 = vmatmul.f32.gmra.mxu0 %v790
  %v930 = vpop.f32.mrf.mxu0
  %v931 = vadd.f32 %v878, %v930
  %932 = vmatmul.f32.gmra.mxu0 %v791
  %v933 = vpop.f32.mrf.mxu0
  %v934 = vadd.f32 %v878, %v933
  %935 = vmatmul.f32.gmra.mxu0 %v792
  %v936 = vpop.f32.mrf.mxu0
  %v937 = vadd.f32 %v879, %v936
  %938 = vmatmul.f32.gmra.mxu0 %v793
  %v939 = vpop.f32.mrf.mxu0
  %v940 = vadd.f32 %v879, %v939
  %941 = vdwg.mxu0
  %v942 = vmax.f32 %v919, 0.0
  %v943 = vmax.f32 %v922, 0.0
  %v944 = vmax.f32 %v925, 0.0
  %v945 = vmax.f32 %v928, 0.0
  %v946 = vmax.f32 %v931, 0.0
  %v947 = vmax.f32 %v934, 0.0
  %v948 = vmax.f32 %v937, 0.0
  %v949 = vmax.f32 %v940, 0.0
  %s950 = scalar_lea.vmem %s5, 512
  %v951 = vld [vmem:[%s950] sm:$0xff]
  %v952 = vld [vmem:[%s950 + $0x8] sm:$0xff]
  %v953 = vld [vmem:[%s950 + $0x10] sm:$0xff]
  %v954 = vld [vmem:[%s950 + $0x18] sm:$0xff]
  %v955 = vld [vmem:[%s950 + $0x20] sm:$0xff]
  %v956 = vld [vmem:[%s950 + $0x28] sm:$0xff]
  %v957 = vld [vmem:[%s950 + $0x30] sm:$0xff]
  %v958 = vld [vmem:[%s950 + $0x38] sm:$0xff]
  %v959 = vld [vmem:[%s950 + $0x40] sm:$0xff]
  %v960 = vld [vmem:[%s950 + $0x48] sm:$0xff]
  %v961 = vld [vmem:[%s950 + $0x50] sm:$0xff]
  %v962 = vld [vmem:[%s950 + $0x58] sm:$0xff]
  %v963 = vld [vmem:[%s950 + $0x60] sm:$0xff]
  %v964 = vld [vmem:[%s950 + $0x68] sm:$0xff]
  %v965 = vld [vmem:[%s950 + $0x70] sm:$0xff]
  %v966 = vld [vmem:[%s950 + $0x78] sm:$0xff]
  %v967 = vld [vmem:[%s950 + $0x80] sm:$0xff]
  %v968 = vld [vmem:[%s950 + $0x88] sm:$0xff]
  %v969 = vld [vmem:[%s950 + $0x90] sm:$0xff]
  %v970 = vld [vmem:[%s950 + $0x98] sm:$0xff]
  %v971 = vld [vmem:[%s950 + $0xa0] sm:$0xff]
  %v972 = vld [vmem:[%s950 + $0xa8] sm:$0xff]
  %v973 = vld [vmem:[%s950 + $0xb0] sm:$0xff]
  %v974 = vld [vmem:[%s950 + $0xb8] sm:$0xff]
  %v975 = vld [vmem:[%s950 + $0xc0] sm:$0xff]
  %v976 = vld [vmem:[%s950 + $0xc8] sm:$0xff]
  %v977 = vld [vmem:[%s950 + $0xd0] sm:$0xff]
  %v978 = vld [vmem:[%s950 + $0xd8] sm:$0xff]
  %v979 = vld [vmem:[%s950 + $0xe0] sm:$0xff]
  %v980 = vld [vmem:[%s950 + $0xe8] sm:$0xff]
  %v981 = vld [vmem:[%s950 + $0xf0] sm:$0xff]
  %v982 = vld [vmem:[%s950 + $0xf8] sm:$0xff]
  %983 = vmatpush.msra.mxu0 %v981
  %984 = vmatpush.msra.mxu0 %v979
  %985 = vmatpush.msra.mxu0 %v977
  %986 = vmatpush.msra.mxu0 %v975
  %987 = vmatpush.msra.mxu0 %v973
  %988 = vmatpush.msra.mxu0 %v971
  %989 = vmatpush.msra.mxu0 %v969
  %990 = vmatpush.msra.mxu0 %v967
  %991 = vmatpush.msra.mxu0 %v965
  %992 = vmatpush.msra.mxu0 %v963
  %993 = vmatpush.msra.mxu0 %v961
  %994 = vmatpush.msra.mxu0 %v959
  %995 = vmatpush.msra.mxu0 %v957
  %996 = vmatpush.msra.mxu0 %v955
  %997 = vmatpush.msra.mxu0 %v953
  %998 = vmatpush.msra.mxu0 %v951
  %999 = vmatmul.f32.gmra.mxu0 %v942
  %v1000 = vpop.f32.mrf.mxu0
  %v1001 = vadd.f32 0.0, %v1000
  %1002 = vmatmul.f32.gmra.mxu0 %v943
  %v1003 = vpop.f32.mrf.mxu0
  %v1004 = vadd.f32 0.0, %v1003
  %1005 = vmatmul.f32.gmra.mxu0 %v944
  %v1006 = vpop.f32.mrf.mxu0
  %v1007 = vadd.f32 0.0, %v1006
  %1008 = vmatmul.f32.gmra.mxu0 %v945
  %v1009 = vpop.f32.mrf.mxu0
  %v1010 = vadd.f32 0.0, %v1009
  %1011 = vmatmul.f32.gmra.mxu0 %v946
  %v1012 = vpop.f32.mrf.mxu0
  %v1013 = vadd.f32 0.0, %v1012
  %1014 = vmatmul.f32.gmra.mxu0 %v947
  %v1015 = vpop.f32.mrf.mxu0
  %v1016 = vadd.f32 0.0, %v1015
  %1017 = vmatmul.f32.gmra.mxu0 %v948
  %v1018 = vpop.f32.mrf.mxu0
  %v1019 = vadd.f32 0.0, %v1018
  %1020 = vmatmul.f32.gmra.mxu0 %v949
  %v1021 = vpop.f32.mrf.mxu0
  %v1022 = vadd.f32 0.0, %v1021
  %1023 = vdwg.mxu0
  %1024 = vmatpush.msra.mxu0 %v982
  %1025 = vmatpush.msra.mxu0 %v980
  %1026 = vmatpush.msra.mxu0 %v978
  %1027 = vmatpush.msra.mxu0 %v976
  %1028 = vmatpush.msra.mxu0 %v974
  %1029 = vmatpush.msra.mxu0 %v972
  %1030 = vmatpush.msra.mxu0 %v970
  %1031 = vmatpush.msra.mxu0 %v968
  %1032 = vmatpush.msra.mxu0 %v966
  %1033 = vmatpush.msra.mxu0 %v964
  %1034 = vmatpush.msra.mxu0 %v962
  %1035 = vmatpush.msra.mxu0 %v960
  %1036 = vmatpush.msra.mxu0 %v958
  %1037 = vmatpush.msra.mxu0 %v956
  %1038 = vmatpush.msra.mxu0 %v954
  %1039 = vmatpush.msra.mxu0 %v952
  %1040 = vmatmul.f32.gmra.mxu0 %v942
  %v1041 = vpop.f32.mrf.mxu0
  %v1042 = vadd.f32 0.0, %v1041
  %1043 = vmatmul.f32.gmra.mxu0 %v943
  %v1044 = vpop.f32.mrf.mxu0
  %v1045 = vadd.f32 0.0, %v1044
  %1046 = vmatmul.f32.gmra.mxu0 %v944
  %v1047 = vpop.f32.mrf.mxu0
  %v1048 = vadd.f32 0.0, %v1047
  %1049 = vmatmul.f32.gmra.mxu0 %v945
  %v1050 = vpop.f32.mrf.mxu0
  %v1051 = vadd.f32 0.0, %v1050
  %1052 = vmatmul.f32.gmra.mxu0 %v946
  %v1053 = vpop.f32.mrf.mxu0
  %v1054 = vadd.f32 0.0, %v1053
  %1055 = vmatmul.f32.gmra.mxu0 %v947
  %v1056 = vpop.f32.mrf.mxu0
  %v1057 = vadd.f32 0.0, %v1056
  %1058 = vmatmul.f32.gmra.mxu0 %v948
  %v1059 = vpop.f32.mrf.mxu0
  %v1060 = vadd.f32 0.0, %v1059
  %1061 = vmatmul.f32.gmra.mxu0 %v949
  %v1062 = vpop.f32.mrf.mxu0
  %v1063 = vadd.f32 0.0, %v1062
  %1064 = vdwg.mxu0
  %v1065 = vadd.f32 %v765, %v1042
  %v1066 = vadd.f32 %v766, %v1045
  %v1067 = vadd.f32 %v767, %v1048
  %v1068 = vadd.f32 %v768, %v1051
  %v1069 = vadd.f32 %v769, %v1054
  %v1070 = vadd.f32 %v770, %v1057
  %v1071 = vadd.f32 %v771, %v1060
  %v1072 = vadd.f32 %v772, %v1063
  %s1073 = scalar_lea.vmem %s4, 3
  %v1074 = vld [vmem:[%s1073] sm:$0x1]
  %v1076 = vperm.slane %v1074, 0
  %v1078 = vadd.f32 %v1001, %v1076
  %v1079 = vadd.f32 %v1004, %v1076
  %v1080 = vadd.f32 %v1007, %v1076
  %v1081 = vadd.f32 %v1010, %v1076
  %v1082 = vadd.f32 %v1013, %v1076
  %v1083 = vadd.f32 %v1016, %v1076
  %v1084 = vadd.f32 %v1019, %v1076
  %v1085 = vadd.f32 %v1022, %v1076
  %v1086 = vmax.f32 %v1078, 0.0
  %v1087 = vmax.f32 %v1079, 0.0
  %v1088 = vmax.f32 %v1080, 0.0
  %v1089 = vmax.f32 %v1081, 0.0
  %v1090 = vmax.f32 %v1082, 0.0
  %v1091 = vmax.f32 %v1083, 0.0
  %v1092 = vmax.f32 %v1084, 0.0
  %v1093 = vmax.f32 %v1085, 0.0
  %v1094 = vmax.f32 %v1086, %v1087
  %v1095 = vrot.slane %v1094, 4
  %v1096 = vmax.f32 %v1094, %v1095
  %v1097 = vrot.slane %v1096, 2
  %v1098 = vmax.f32 %v1096, %v1097
  %v1099 = vrot.slane %v1098, 1
  %v1100 = vmax.f32 %v1098, %v1099
  %v1101 = vmax.f32 %v1088, %v1089
  %v1102 = vrot.slane %v1101, 4
  %v1103 = vmax.f32 %v1101, %v1102
  %v1104 = vrot.slane %v1103, 2
  %v1105 = vmax.f32 %v1103, %v1104
  %v1106 = vrot.slane %v1105, 1
  %v1107 = vmax.f32 %v1105, %v1106
  %v1108 = vmax.f32 %v1090, %v1091
  %v1109 = vrot.slane %v1108, 4
  %v1110 = vmax.f32 %v1108, %v1109
  %v1111 = vrot.slane %v1110, 2
  %v1112 = vmax.f32 %v1110, %v1111
  %v1113 = vrot.slane %v1112, 1
  %v1114 = vmax.f32 %v1112, %v1113
  %v1115 = vmax.f32 %v1092, %v1093
  %v1116 = vrot.slane %v1115, 4
  %v1117 = vmax.f32 %v1115, %v1116
  %v1118 = vrot.slane %v1117, 2
  %v1119 = vmax.f32 %v1117, %v1118
  %v1120 = vrot.slane %v1119, 1
  %v1121 = vmax.f32 %v1119, %v1120
  %s1122 = scalar_lea.vmem %s7, 384
  %v1123 = vld [vmem:[%s1122] sm:$0xff]
  %v1124 = vld [vmem:[%s1122 + $0x8] sm:$0xff]
  %v1125 = vld [vmem:[%s1122 + $0x10] sm:$0xff]
  %v1126 = vld [vmem:[%s1122 + $0x18] sm:$0xff]
  %v1127 = vld [vmem:[%s1122 + $0x20] sm:$0xff]
  %v1128 = vld [vmem:[%s1122 + $0x28] sm:$0xff]
  %v1129 = vld [vmem:[%s1122 + $0x30] sm:$0xff]
  %v1130 = vld [vmem:[%s1122 + $0x38] sm:$0xff]
  %v1131 = vld [vmem:[%s1122 + $0x40] sm:$0xff]
  %v1132 = vld [vmem:[%s1122 + $0x48] sm:$0xff]
  %v1133 = vld [vmem:[%s1122 + $0x50] sm:$0xff]
  %v1134 = vld [vmem:[%s1122 + $0x58] sm:$0xff]
  %v1135 = vld [vmem:[%s1122 + $0x60] sm:$0xff]
  %v1136 = vld [vmem:[%s1122 + $0x68] sm:$0xff]
  %v1137 = vld [vmem:[%s1122 + $0x70] sm:$0xff]
  %v1138 = vld [vmem:[%s1122 + $0x78] sm:$0xff]
  %s1139 = scalar_lea.vmem %s8, 3
  %v1140 = vld [vmem:[%s1139] sm:$0x1]
  %v1142 = vperm.slane %v1140, 0
  %v1148 = vsel %vm247, %v1107, %v1100
  %v1149 = vsel %vm249, %v1114, %v1148
  %v1150 = vsel %vm251, %v1121, %v1149
  %1152 = vmatpush.msra.mxu0 %v1138
  %1153 = vmatpush.msra.mxu0 %v1137
  %1154 = vmatpush.msra.mxu0 %v1136
  %1155 = vmatpush.msra.mxu0 %v1135
  %1156 = vmatpush.msra.mxu0 %v1134
  %1157 = vmatpush.msra.mxu0 %v1133
  %1158 = vmatpush.msra.mxu0 %v1132
  %1159 = vmatpush.msra.mxu0 %v1131
  %1160 = vmatpush.msra.mxu0 %v1130
  %1161 = vmatpush.msra.mxu0 %v1129
  %1162 = vmatpush.msra.mxu0 %v1128
  %1163 = vmatpush.msra.mxu0 %v1127
  %1164 = vmatpush.msra.mxu0 %v1126
  %1165 = vmatpush.msra.mxu0 %v1125
  %1166 = vmatpush.msra.mxu0 %v1124
  %1167 = vmatpush.msra.mxu0 %v1123
  %1168 = vmatmul.f32.gmra.mxu0 %v1150
  %v1169 = vpop.f32.mrf.mxu0
  %v1170 = vadd.f32 %v1142, %v1169
  %1171 = vdwg.mxu0
  %v1173 = vrot.slane %v1170, 1
  %v1174 = vrot.slane %v1170, 2
  %v1175 = vrot.slane %v1170, 3
  %v1176 = vperm.slane %v1170, 0
  %v1177 = vperm.slane %v1173, 0
  %v1178 = vperm.slane %v1174, 0
  %v1179 = vperm.slane %v1175, 0
  %s1184 = scalar_lea.vmem %s6, 384
  %v1185 = vld [vmem:[%s1184] sm:$0xff]
  %v1186 = vld [vmem:[%s1184 + $0x8] sm:$0xff]
  %v1187 = vld [vmem:[%s1184 + $0x10] sm:$0xff]
  %v1188 = vld [vmem:[%s1184 + $0x18] sm:$0xff]
  %v1189 = vld [vmem:[%s1184 + $0x20] sm:$0xff]
  %v1190 = vld [vmem:[%s1184 + $0x28] sm:$0xff]
  %v1191 = vld [vmem:[%s1184 + $0x30] sm:$0xff]
  %v1192 = vld [vmem:[%s1184 + $0x38] sm:$0xff]
  %v1193 = vld [vmem:[%s1184 + $0x40] sm:$0xff]
  %v1194 = vld [vmem:[%s1184 + $0x48] sm:$0xff]
  %v1195 = vld [vmem:[%s1184 + $0x50] sm:$0xff]
  %v1196 = vld [vmem:[%s1184 + $0x58] sm:$0xff]
  %v1197 = vld [vmem:[%s1184 + $0x60] sm:$0xff]
  %v1198 = vld [vmem:[%s1184 + $0x68] sm:$0xff]
  %v1199 = vld [vmem:[%s1184 + $0x70] sm:$0xff]
  %v1200 = vld [vmem:[%s1184 + $0x78] sm:$0xff]
  %1201 = vmatpush.msra.mxu0 %v1200
  %1202 = vmatpush.msra.mxu0 %v1199
  %1203 = vmatpush.msra.mxu0 %v1198
  %1204 = vmatpush.msra.mxu0 %v1197
  %1205 = vmatpush.msra.mxu0 %v1196
  %1206 = vmatpush.msra.mxu0 %v1195
  %1207 = vmatpush.msra.mxu0 %v1194
  %1208 = vmatpush.msra.mxu0 %v1193
  %1209 = vmatpush.msra.mxu0 %v1192
  %1210 = vmatpush.msra.mxu0 %v1191
  %1211 = vmatpush.msra.mxu0 %v1190
  %1212 = vmatpush.msra.mxu0 %v1189
  %1213 = vmatpush.msra.mxu0 %v1188
  %1214 = vmatpush.msra.mxu0 %v1187
  %1215 = vmatpush.msra.mxu0 %v1186
  %1216 = vmatpush.msra.mxu0 %v1185
  %1217 = vmatmul.f32.gmra.mxu0 %v1086
  %v1218 = vpop.f32.mrf.mxu0
  %v1219 = vadd.f32 %v1176, %v1218
  %1220 = vmatmul.f32.gmra.mxu0 %v1087
  %v1221 = vpop.f32.mrf.mxu0
  %v1222 = vadd.f32 %v1176, %v1221
  %1223 = vmatmul.f32.gmra.mxu0 %v1088
  %v1224 = vpop.f32.mrf.mxu0
  %v1225 = vadd.f32 %v1177, %v1224
  %1226 = vmatmul.f32.gmra.mxu0 %v1089
  %v1227 = vpop.f32.mrf.mxu0
  %v1228 = vadd.f32 %v1177, %v1227
  %1229 = vmatmul.f32.gmra.mxu0 %v1090
  %v1230 = vpop.f32.mrf.mxu0
  %v1231 = vadd.f32 %v1178, %v1230
  %1232 = vmatmul.f32.gmra.mxu0 %v1091
  %v1233 = vpop.f32.mrf.mxu0
  %v1234 = vadd.f32 %v1178, %v1233
  %1235 = vmatmul.f32.gmra.mxu0 %v1092
  %v1236 = vpop.f32.mrf.mxu0
  %v1237 = vadd.f32 %v1179, %v1236
  %1238 = vmatmul.f32.gmra.mxu0 %v1093
  %v1239 = vpop.f32.mrf.mxu0
  %v1240 = vadd.f32 %v1179, %v1239
  %1241 = vdwg.mxu0
  %v1242 = vmax.f32 %v1219, 0.0
  %v1243 = vmax.f32 %v1222, 0.0
  %v1244 = vmax.f32 %v1225, 0.0
  %v1245 = vmax.f32 %v1228, 0.0
  %v1246 = vmax.f32 %v1231, 0.0
  %v1247 = vmax.f32 %v1234, 0.0
  %v1248 = vmax.f32 %v1237, 0.0
  %v1249 = vmax.f32 %v1240, 0.0
  %v1250 = vld [vmem:[%s9] sm:$0xff]
  %v1251 = vld [vmem:[%s9 + $0x8] sm:$0xff]
  %v1252 = vld [vmem:[%s9 + $0x10] sm:$0xff]
  %v1253 = vld [vmem:[%s9 + $0x18] sm:$0xff]
  %v1254 = vld [vmem:[%s9 + $0x20] sm:$0xff]
  %v1255 = vld [vmem:[%s9 + $0x28] sm:$0xff]
  %v1256 = vld [vmem:[%s9 + $0x30] sm:$0xff]
  %v1257 = vld [vmem:[%s9 + $0x38] sm:$0xff]
  %v1258 = vld [vmem:[%s9 + $0x40] sm:$0xff]
  %v1259 = vld [vmem:[%s9 + $0x48] sm:$0xff]
  %v1260 = vld [vmem:[%s9 + $0x50] sm:$0xff]
  %v1261 = vld [vmem:[%s9 + $0x58] sm:$0xff]
  %v1262 = vld [vmem:[%s9 + $0x60] sm:$0xff]
  %v1263 = vld [vmem:[%s9 + $0x68] sm:$0xff]
  %v1264 = vld [vmem:[%s9 + $0x70] sm:$0xff]
  %v1265 = vld [vmem:[%s9 + $0x78] sm:$0xff]
  %1266 = vmatpush.msra.mxu0 %v1265
  %1267 = vmatpush.msra.mxu0 %v1264
  %1268 = vmatpush.msra.mxu0 %v1263
  %1269 = vmatpush.msra.mxu0 %v1262
  %1270 = vmatpush.msra.mxu0 %v1261
  %1271 = vmatpush.msra.mxu0 %v1260
  %1272 = vmatpush.msra.mxu0 %v1259
  %1273 = vmatpush.msra.mxu0 %v1258
  %1274 = vmatpush.msra.mxu0 %v1257
  %1275 = vmatpush.msra.mxu0 %v1256
  %1276 = vmatpush.msra.mxu0 %v1255
  %1277 = vmatpush.msra.mxu0 %v1254
  %1278 = vmatpush.msra.mxu0 %v1253
  %1279 = vmatpush.msra.mxu0 %v1252
  %1280 = vmatpush.msra.mxu0 %v1251
  %1281 = vmatpush.msra.mxu0 %v1250
  %1282 = vmatmul.f32.gmra.mxu0 %v1242
  %v1283 = vpop.f32.mrf.mxu0
  %v1284 = vadd.f32 0.0, %v1283
  %1285 = vmatmul.f32.gmra.mxu0 %v1243
  %v1286 = vpop.f32.mrf.mxu0
  %v1287 = vadd.f32 0.0, %v1286
  %1288 = vmatmul.f32.gmra.mxu0 %v1244
  %v1289 = vpop.f32.mrf.mxu0
  %v1290 = vadd.f32 0.0, %v1289
  %1291 = vmatmul.f32.gmra.mxu0 %v1245
  %v1292 = vpop.f32.mrf.mxu0
  %v1293 = vadd.f32 0.0, %v1292
  %1294 = vmatmul.f32.gmra.mxu0 %v1246
  %v1295 = vpop.f32.mrf.mxu0
  %v1296 = vadd.f32 0.0, %v1295
  %1297 = vmatmul.f32.gmra.mxu0 %v1247
  %v1298 = vpop.f32.mrf.mxu0
  %v1299 = vadd.f32 0.0, %v1298
  %1300 = vmatmul.f32.gmra.mxu0 %v1248
  %v1301 = vpop.f32.mrf.mxu0
  %v1302 = vadd.f32 0.0, %v1301
  %1303 = vmatmul.f32.gmra.mxu0 %v1249
  %v1304 = vpop.f32.mrf.mxu0
  %v1305 = vadd.f32 0.0, %v1304
  %1306 = vdwg.mxu0
  %v1307 = vadd.f32 %v1065, %v1284
  %v1308 = vadd.f32 %v1066, %v1287
  %v1309 = vadd.f32 %v1067, %v1290
  %v1310 = vadd.f32 %v1068, %v1293
  %v1311 = vadd.f32 %v1069, %v1296
  %v1312 = vadd.f32 %v1070, %v1299
  %v1313 = vadd.f32 %v1071, %v1302
  %v1314 = vadd.f32 %v1072, %v1305
  %v1315 = vld [vmem:[%s10] sm:$0x1]
  %v1317 = vperm.slane %v1315, 0
  %v1319 = vadd.f32 %v1307, %v1317
  %v1320 = vadd.f32 %v1308, %v1317
  %v1321 = vadd.f32 %v1309, %v1317
  %v1322 = vadd.f32 %v1310, %v1317
  %v1323 = vadd.f32 %v1311, %v1317
  %v1324 = vadd.f32 %v1312, %v1317
  %v1325 = vadd.f32 %v1313, %v1317
  %v1326 = vadd.f32 %v1314, %v1317
  %v1327 = vmax.f32 %v1319, %v1320
  %v1328 = vrot.slane %v1327, 4
  %v1329 = vmax.f32 %v1327, %v1328
  %v1330 = vrot.slane %v1329, 2
  %v1331 = vmax.f32 %v1329, %v1330
  %v1332 = vrot.slane %v1331, 1
  %v1333 = vmax.f32 %v1331, %v1332
  %v1334 = vmax.f32 %v1321, %v1322
  %v1335 = vrot.slane %v1334, 4
  %v1336 = vmax.f32 %v1334, %v1335
  %v1337 = vrot.slane %v1336, 2
  %v1338 = vmax.f32 %v1336, %v1337
  %v1339 = vrot.slane %v1338, 1
  %v1340 = vmax.f32 %v1338, %v1339
  %v1341 = vmax.f32 %v1323, %v1324
  %v1342 = vrot.slane %v1341, 4
  %v1343 = vmax.f32 %v1341, %v1342
  %v1344 = vrot.slane %v1343, 2
  %v1345 = vmax.f32 %v1343, %v1344
  %v1346 = vrot.slane %v1345, 1
  %v1347 = vmax.f32 %v1345, %v1346
  %v1348 = vmax.f32 %v1325, %v1326
  %v1349 = vrot.slane %v1348, 4
  %v1350 = vmax.f32 %v1348, %v1349
  %v1351 = vrot.slane %v1350, 2
  %v1352 = vmax.f32 %v1350, %v1351
  %v1353 = vrot.slane %v1352, 1
  %v1354 = vmax.f32 %v1352, %v1353
  %v1359 = vsel %vm247, %v1340, %v1333
  %v1360 = vsel %vm249, %v1347, %v1359
  %v1361 = vsel %vm251, %v1354, %v1360
  %1363 = vst [vmem:[%s11] sm:$0xf] %v1361
  // Predicated region
  $region46: #{point_encoder_forward.1} parent=0 // pred_check
    _
  $region47: #{point_encoder_forward.1} parent=0 // pred_check_branch
    %1365 = sbr.rel (0) target = $region49
  $region48: #{point_encoder_forward.1} parent=0 // pred_region
    _
  $region49: #{point_encoder_forward.1} parent=0 // pred_fallthru
    _
  // Predicated region
  $region50: #{point_encoder_forward.1} parent=0 // pred_check
    _
  $region51: #{point_encoder_forward.1} parent=0 // pred_check_branch
    %1367 = sbr.rel (0) target = $region53
  $region52: #{point_encoder_forward.1} parent=0 // pred_region
    _
  $region53: #{point_encoder_forward.1} parent=0 // pred_fallthru
    _

</llo_original>
